<compile_context>
chip_gen: v7x
topology: tpu7x:2x2x1
jax: 0.10.0
libtpu: 0.0.40
codegen_flags: <defaults>
</compile_context>

<pallas_src>
import functools

import jax
import jax.numpy as jnp
from jax.experimental import pallas as pl
from jax.experimental.pallas import tpu as pltpu

EPS = 1e-5
LANE = 128


# ---------------------------------------------------------------------------
# Fused kernel: LN -> proj -> (theta|phi) and (dist|omega) heads, one store.
# ---------------------------------------------------------------------------
def fused_pair_kernel(z_ref, zt_ref, g_ref, b_ref, pw_ref, pb_ref,
                      w1s_ref, b1s_ref, w1a_ref, b1a_ref,
                      w2s_ref, w2a_ref, b2_ref, o_ref):
    za = z_ref[...].astype(jnp.float32)      # [tm, C]  rows of z
    zb = zt_ref[...].astype(jnp.float32)     # [tm, C]  transposed partner rows
    g = g_ref[...]
    beta = b_ref[...]

    def layer_norm(x):                       # f32 VPU/EUP math (unbiased=False)
        mean = jnp.mean(x, axis=-1, keepdims=True)
        var = jnp.mean((x - mean) ** 2, axis=-1, keepdims=True)
        return g * (x - mean) * jax.lax.rsqrt(var + EPS) + beta

    ln_a = layer_norm(za)
    # proj is affine: 0.5*(proj(ln_a)+proj(ln_b)) == proj(0.5*(ln_a+ln_b))
    ln_s = 0.5 * (ln_a + layer_norm(zb))

    mm_dtype = pw_ref.dtype                  # bf16 on the MXU, f32 accumulate
    pw = pw_ref[...]
    pb = pb_ref[...]
    x_a = jnp.dot(ln_a.astype(mm_dtype), pw,
                  preferred_element_type=jnp.float32) + pb      # [tm, C]
    x_s = jnp.dot(ln_s.astype(mm_dtype), pw,
                  preferred_element_type=jnp.float32) + pb      # [tm, C]

    # first MLP layers, heads paired along the N dim of the matmul
    h_a = jnp.maximum(
        jnp.dot(x_a.astype(mm_dtype), w1a_ref[...],
                preferred_element_type=jnp.float32) + b1a_ref[...], 0.0)  # [tm, 2F]
    h_s = jnp.maximum(
        jnp.dot(x_s.astype(mm_dtype), w1s_ref[...],
                preferred_element_type=jnp.float32) + b1s_ref[...], 0.0)  # [tm, 2F]

    # second MLP layers write into one 128-lane padded slab
    out = (jnp.dot(h_s.astype(mm_dtype), w2s_ref[...],
                   preferred_element_type=jnp.float32)
           + jnp.dot(h_a.astype(mm_dtype), w2a_ref[...],
                     preferred_element_type=jnp.float32)
           + b2_ref[...])                                        # [tm, OUT_PAD]
    o_ref[...] = out.astype(o_ref.dtype)


# ---------------------------------------------------------------------------
# Parameter construction (deterministic, synthetic) + fusion/padding helpers
# ---------------------------------------------------------------------------
def make_params(key, c_z, bins):
    ks = iter(jax.random.split(key, 32))

    def lin(k, din, dout):
        kw, kb = jax.random.split(k)
        w = jax.random.normal(kw, (din, dout), jnp.float32) * (1.0 / jnp.sqrt(din))
        b = jax.random.normal(kb, (1, dout), jnp.float32) * 0.01
        return w, b

    params = {
        "ln_gamma": jnp.ones((1, c_z), jnp.float32),
        "ln_beta": jnp.zeros((1, c_z), jnp.float32),
    }
    params["proj_w"], params["proj_b"] = lin(next(ks), c_z, c_z)
    for name, nb in zip(("dist", "omega", "theta", "phi"), bins):
        w1, b1 = lin(next(ks), c_z, 4 * c_z)
        w2, b2 = lin(next(ks), 4 * c_z, nb)
        params[name] = (w1, b1, w2, b2)
    return params


def _fuse_params(params, bins, c_z, out_pad, mm_dtype):
    F = 4 * c_z
    dist_w1, dist_b1, dist_w2, dist_b2 = params["dist"]
    omega_w1, omega_b1, omega_w2, omega_b2 = params["omega"]
    theta_w1, theta_b1, theta_w2, theta_b2 = params["theta"]
    phi_w1, phi_b1, phi_w2, phi_b2 = params["phi"]

    # paired first layers: sym = (dist, omega), asym = (theta, phi)
    w1s = jnp.concatenate([dist_w1, omega_w1], axis=1).astype(mm_dtype)   # [C, 2F]
    b1s = jnp.concatenate([dist_b1, omega_b1], axis=1)                    # [1, 2F] f32
    w1a = jnp.concatenate([theta_w1, phi_w1], axis=1).astype(mm_dtype)
    b1a = jnp.concatenate([theta_b1, phi_b1], axis=1)

    # second layers into a single lane-dense slab:
    #   cols [0:37) dist | [37:62) omega | [62:87) theta | [87:112) phi | pad
    c1 = bins[0]
    c2 = c1 + bins[1]
    c3 = c2 + bins[2]
    c4 = c3 + bins[3]
    w2s = jnp.zeros((2 * F, out_pad), jnp.float32)
    w2s = w2s.at[:F, 0:c1].set(dist_w2)
    w2s = w2s.at[F:, c1:c2].set(omega_w2)
    w2a = jnp.zeros((2 * F, out_pad), jnp.float32)
    w2a = w2a.at[:F, c2:c3].set(theta_w2)
    w2a = w2a.at[F:, c3:c4].set(phi_w2)
    b2 = jnp.zeros((1, out_pad), jnp.float32)
    b2 = b2.at[:, 0:c1].set(dist_b2)
    b2 = b2.at[:, c1:c2].set(omega_b2)
    b2 = b2.at[:, c2:c3].set(theta_b2)
    b2 = b2.at[:, c3:c4].set(phi_b2)

    return dict(
        gamma=params["ln_gamma"], beta=params["ln_beta"],
        pw=params["proj_w"].astype(mm_dtype), pb=params["proj_b"],
        w1s=w1s, b1s=b1s, w1a=w1a, b1a=b1a,
        w2s=w2s.astype(mm_dtype), w2a=w2a.astype(mm_dtype), b2=b2,
    )


# ---------------------------------------------------------------------------
# PairPredictor forward
# ---------------------------------------------------------------------------
@functools.partial(jax.jit, static_argnames=("bins", "tm", "mm_dtype"))
def pair_predictor_forward(z, params, *, bins=(37, 25, 25, 25), tm=256,
                           mm_dtype=jnp.bfloat16):
    B, L, L2, C = z.shape
    assert L == L2
    N = B * L * L
    F = 4 * C
    out_dim = sum(bins)
    out_pad = ((out_dim + LANE - 1) // LANE) * LANE

    fp = _fuse_params(params, bins, C, out_pad, mm_dtype)

    # Row-aligned transposed-partner stream for in-kernel symmetrization.
    # TODO(synk): fold this XLA transpose into the kernel with a (b, i, j) grid
    # and a (b,i,j)->(b,j,i) index_map + in-VMEM square-tile transpose.
    zt = jnp.swapaxes(z, 1, 2)

    z_flat = z.reshape(N, C)
    zt_flat = zt.reshape(N, C)

    # Tail handling: pad rows to a tile multiple (tm must stay a multiple of 8).
    tm = min(tm, max(8, ((N + 7) // 8) * 8))
    n_pad = pl.cdiv(N, tm) * tm
    if n_pad != N:
        z_flat = jnp.pad(z_flat, ((0, n_pad - N), (0, 0)))
        zt_flat = jnp.pad(zt_flat, ((0, n_pad - N), (0, 0)))

    grid = (n_pad // tm,)
    const = lambda i: (0, 0)   # weights/biases: constant blocks

    out_flat = pl.pallas_call(
        fused_pair_kernel,
        out_shape=jax.ShapeDtypeStruct((n_pad, out_pad), jnp.float32),
        grid_spec=pltpu.PrefetchScalarGridSpec(
            num_scalar_prefetch=0,
            grid=grid,
            in_specs=[
                pl.BlockSpec((tm, C), lambda i: (i, 0)),      # z rows
                pl.BlockSpec((tm, C), lambda i: (i, 0)),      # zT rows
                pl.BlockSpec((1, C), const),                  # LN gamma
                pl.BlockSpec((1, C), const),                  # LN beta
                pl.BlockSpec((C, C), const),                  # proj W
                pl.BlockSpec((1, C), const),                  # proj b
                pl.BlockSpec((C, 2 * F), const),              # W1 dist|omega
                pl.BlockSpec((1, 2 * F), const),              # b1 dist|omega
                pl.BlockSpec((C, 2 * F), const),              # W1 theta|phi
                pl.BlockSpec((1, 2 * F), const),              # b1 theta|phi
                pl.BlockSpec((2 * F, out_pad), const),        # W2 sym slab
                pl.BlockSpec((2 * F, out_pad), const),        # W2 asym slab
                pl.BlockSpec((1, out_pad), const),            # b2 slab
            ],
            out_specs=pl.BlockSpec((tm, out_pad), lambda i: (i, 0)),
        ),
        compiler_params=pltpu.CompilerParams(
            dimension_semantics=("parallel",),
            vmem_limit_bytes=48 * 1024 * 1024),   # headroom even on v7x's 64 MiB
    )(z_flat, zt_flat, fp["gamma"], fp["beta"], fp["pw"], fp["pb"],
      fp["w1s"], fp["b1s"], fp["w1a"], fp["b1a"],
      fp["w2s"], fp["w2a"], fp["b2"])

    out = out_flat[:N]
    c1 = bins[0]
    c2 = c1 + bins[1]
    c3 = c2 + bins[2]
    c4 = c3 + bins[3]

    def head(lo, hi):
        nb = hi - lo
        # TODO(synk): keep NHWC if the consumer allows; this permute matches
        # PyTorch's .permute(0, 3, 1, 2) and is a separate XLA relayout pass.
        return out[:, lo:hi].reshape(B, L, L, nb).transpose(0, 3, 1, 2)

    logits_dist = head(0, c1)
    logits_omega = head(c1, c2)
    logits_theta = head(c2, c3)
    logits_phi = head(c3, c4)
    return logits_dist, logits_omega, logits_theta, logits_phi


# ---------------------------------------------------------------------------
# Pure-JAX f32 reference (PyTorch semantics) for a sanity check
# ---------------------------------------------------------------------------
def reference_forward(z, params):
    g = params["ln_gamma"][0]
    b = params["ln_beta"][0]
    mean = z.mean(-1, keepdims=True)
    var = ((z - mean) ** 2).mean(-1, keepdims=True)
    zn = g * (z - mean) / jnp.sqrt(var + EPS) + b
    zp = zn @ params["proj_w"] + params["proj_b"][0]

    def mlp(x, p):
        w1, b1, w2, b2 = p
        h = jnp.maximum(x @ w1 + b1[0], 0.0)
        return h @ w2 + b2[0]

    theta = mlp(zp, params["theta"])
    phi = mlp(zp, params["phi"])
    zs = 0.5 * (zp + jnp.swapaxes(zp, 1, 2))
    dist = mlp(zs, params["dist"])
    omega = mlp(zs, params["omega"])
    perm = lambda x: jnp.transpose(x, (0, 3, 1, 2))
    return perm(dist), perm(omega), perm(theta), perm(phi)


if __name__ == "__main__":
    B, L, C = 2, 8, 32
    bins = (37, 25, 25, 25)

    key = jax.random.PRNGKey(0)
    kz, kp = jax.random.split(key)
    z = jax.random.normal(kz, (B, L, L, C), jnp.float32)
    params = make_params(kp, C, bins)

    outs = pair_predictor_forward(z, params, bins=bins, tm=256)
    outs = jax.block_until_ready(outs)

    expected_shapes = [(B, nb, L, L) for nb in bins]
    assert [tuple(o.shape) for o in outs] == expected_shapes, \
        [tuple(o.shape) for o in outs]
    assert all(bool(jnp.all(jnp.isfinite(o))) for o in outs)

    # numeric check vs f32 reference (kernel uses bf16 MXU, f32 accumulate)
    refs = reference_forward(z, params)
    for got, want in zip(outs, refs):
        err = float(jnp.max(jnp.abs(got - want)))
        assert err < 0.1, f"max abs err {err}"

    print("KERNEL_OK")
</pallas_src>

<mosaic_0001>
module attributes {stable_mosaic.version = 11 : i64} {
  func.func @fused_pair_kernel(%arg0: i32, %arg1: memref<128x32xf32, #tpu.memory_space<vmem>>, %arg2: memref<128x32xf32, #tpu.memory_space<vmem>>, %arg3: memref<1x32xf32, #tpu.memory_space<vmem>>, %arg4: memref<1x32xf32, #tpu.memory_space<vmem>>, %arg5: memref<32x32xbf16, #tpu.memory_space<vmem>>, %arg6: memref<1x32xf32, #tpu.memory_space<vmem>>, %arg7: memref<32x256xbf16, #tpu.memory_space<vmem>>, %arg8: memref<1x256xf32, #tpu.memory_space<vmem>>, %arg9: memref<32x256xbf16, #tpu.memory_space<vmem>>, %arg10: memref<1x256xf32, #tpu.memory_space<vmem>>, %arg11: memref<256x128xbf16, #tpu.memory_space<vmem>>, %arg12: memref<256x128xbf16, #tpu.memory_space<vmem>>, %arg13: memref<1x128xf32, #tpu.memory_space<vmem>>, %arg14: memref<128x128xf32, #tpu.memory_space<vmem>>) attributes {dimension_semantics = [#tpu.dimension_semantics<parallel>], iteration_bounds = array<i64: 1>, scalar_prefetch = 0 : i64, scratch_operands = 0 : i64, tpu.core_type = #tpu.core_type<tc>, window_params = [{transform_indices = @transform_0, window_bounds = array<i64: 128, 32>}, {transform_indices = @transform_1, window_bounds = array<i64: 128, 32>}, {pipeline_mode = #tpu.pipeline_mode<synchronous>, transform_indices = @transform_2, window_bounds = array<i64: 1, 32>}, {pipeline_mode = #tpu.pipeline_mode<synchronous>, transform_indices = @transform_3, window_bounds = array<i64: 1, 32>}, {pipeline_mode = #tpu.pipeline_mode<synchronous>, transform_indices = @transform_4, window_bounds = array<i64: 32, 32>}, {pipeline_mode = #tpu.pipeline_mode<synchronous>, transform_indices = @transform_5, window_bounds = array<i64: 1, 32>}, {pipeline_mode = #tpu.pipeline_mode<synchronous>, transform_indices = @transform_6, window_bounds = array<i64: 32, 256>}, {pipeline_mode = #tpu.pipeline_mode<synchronous>, transform_indices = @transform_7, window_bounds = array<i64: 1, 256>}, {pipeline_mode = #tpu.pipeline_mode<synchronous>, transform_indices = @transform_8, window_bounds = array<i64: 32, 256>}, {pipeline_mode = #tpu.pipeline_mode<synchronous>, transform_indices = @transform_9, window_bounds = array<i64: 1, 256>}, {pipeline_mode = #tpu.pipeline_mode<synchronous>, transform_indices = @transform_10, window_bounds = array<i64: 256, 128>}, {pipeline_mode = #tpu.pipeline_mode<synchronous>, transform_indices = @transform_11, window_bounds = array<i64: 256, 128>}, {pipeline_mode = #tpu.pipeline_mode<synchronous>, transform_indices = @transform_12, window_bounds = array<i64: 1, 128>}, {transform_indices = @transform_13, window_bounds = array<i64: 128, 128>}]} {
    %c0 = arith.constant 0 : index
    %c0_0 = arith.constant 0 : index
    %0 = vector.load %arg1[%c0, %c0_0] : memref<128x32xf32, #tpu.memory_space<vmem>>, vector<128x32xf32>
    %c0_1 = arith.constant 0 : index
    %c0_2 = arith.constant 0 : index
    %1 = vector.load %arg2[%c0_1, %c0_2] : memref<128x32xf32, #tpu.memory_space<vmem>>, vector<128x32xf32>
    %c0_3 = arith.constant 0 : index
    %c0_4 = arith.constant 0 : index
    %2 = vector.load %arg3[%c0_3, %c0_4] : memref<1x32xf32, #tpu.memory_space<vmem>>, vector<1x32xf32>
    %c0_5 = arith.constant 0 : index
    %c0_6 = arith.constant 0 : index
    %3 = vector.load %arg4[%c0_5, %c0_6] : memref<1x32xf32, #tpu.memory_space<vmem>>, vector<1x32xf32>
    %cst = arith.constant dense<0.000000e+00> : vector<128xf32>
    %4 = vector.multi_reduction <add>, %0, %cst [1] : vector<128x32xf32> to vector<128xf32>
    %5 = vector.shape_cast %4 : vector<128xf32> to vector<128x1xf32>
    %cst_7 = arith.constant 3.200000e+01 : f32
    %6 = vector.broadcast %cst_7 : f32 to vector<128x1xf32>
    %7 = arith.divf %5, %6 : vector<128x1xf32>
    %8 = vector.broadcast %7 : vector<128x1xf32> to vector<128x32xf32>
    %9 = arith.subf %0, %8 : vector<128x32xf32>
    %10 = arith.mulf %9, %9 : vector<128x32xf32>
    %cst_8 = arith.constant dense<0.000000e+00> : vector<128xf32>
    %11 = vector.multi_reduction <add>, %10, %cst_8 [1] : vector<128x32xf32> to vector<128xf32>
    %12 = vector.shape_cast %11 : vector<128xf32> to vector<128x1xf32>
    %cst_9 = arith.constant 3.200000e+01 : f32
    %13 = vector.broadcast %cst_9 : f32 to vector<128x1xf32>
    %14 = arith.divf %12, %13 : vector<128x1xf32>
    %15 = vector.broadcast %7 : vector<128x1xf32> to vector<128x32xf32>
    %16 = arith.subf %0, %15 : vector<128x32xf32>
    %17 = vector.broadcast %2 : vector<1x32xf32> to vector<128x32xf32>
    %18 = arith.mulf %17, %16 : vector<128x32xf32>
    %cst_10 = arith.constant 9.99999974E-6 : f32
    %19 = vector.broadcast %cst_10 : f32 to vector<128x1xf32>
    %20 = arith.addf %14, %19 : vector<128x1xf32>
    %21 = math.rsqrt %20 : vector<128x1xf32>
    %22 = vector.broadcast %21 : vector<128x1xf32> to vector<128x32xf32>
    %23 = arith.mulf %18, %22 : vector<128x32xf32>
    %24 = vector.broadcast %3 : vector<1x32xf32> to vector<128x32xf32>
    %25 = arith.addf %23, %24 : vector<128x32xf32>
    %cst_11 = arith.constant dense<0.000000e+00> : vector<128xf32>
    %26 = vector.multi_reduction <add>, %1, %cst_11 [1] : vector<128x32xf32> to vector<128xf32>
    %27 = vector.shape_cast %26 : vector<128xf32> to vector<128x1xf32>
    %cst_12 = arith.constant 3.200000e+01 : f32
    %28 = vector.broadcast %cst_12 : f32 to vector<128x1xf32>
    %29 = arith.divf %27, %28 : vector<128x1xf32>
    %30 = vector.broadcast %29 : vector<128x1xf32> to vector<128x32xf32>
    %31 = arith.subf %1, %30 : vector<128x32xf32>
    %32 = arith.mulf %31, %31 : vector<128x32xf32>
    %cst_13 = arith.constant dense<0.000000e+00> : vector<128xf32>
    %33 = vector.multi_reduction <add>, %32, %cst_13 [1] : vector<128x32xf32> to vector<128xf32>
    %34 = vector.shape_cast %33 : vector<128xf32> to vector<128x1xf32>
    %cst_14 = arith.constant 3.200000e+01 : f32
    %35 = vector.broadcast %cst_14 : f32 to vector<128x1xf32>
    %36 = arith.divf %34, %35 : vector<128x1xf32>
    %37 = vector.broadcast %29 : vector<128x1xf32> to vector<128x32xf32>
    %38 = arith.subf %1, %37 : vector<128x32xf32>
    %39 = vector.broadcast %2 : vector<1x32xf32> to vector<128x32xf32>
    %40 = arith.mulf %39, %38 : vector<128x32xf32>
    %cst_15 = arith.constant 9.99999974E-6 : f32
    %41 = vector.broadcast %cst_15 : f32 to vector<128x1xf32>
    %42 = arith.addf %36, %41 : vector<128x1xf32>
    %43 = math.rsqrt %42 : vector<128x1xf32>
    %44 = vector.broadcast %43 : vector<128x1xf32> to vector<128x32xf32>
    %45 = arith.mulf %40, %44 : vector<128x32xf32>
    %46 = vector.broadcast %3 : vector<1x32xf32> to vector<128x32xf32>
    %47 = arith.addf %45, %46 : vector<128x32xf32>
    %48 = arith.addf %25, %47 : vector<128x32xf32>
    %cst_16 = arith.constant 5.000000e-01 : f32
    %49 = vector.broadcast %cst_16 : f32 to vector<128x32xf32>
    %50 = arith.mulf %49, %48 : vector<128x32xf32>
    %c0_17 = arith.constant 0 : index
    %c0_18 = arith.constant 0 : index
    %51 = vector.load %arg5[%c0_17, %c0_18] : memref<32x32xbf16, #tpu.memory_space<vmem>>, vector<32x32xbf16>
    %c0_19 = arith.constant 0 : index
    %c0_20 = arith.constant 0 : index
    %52 = vector.load %arg6[%c0_19, %c0_20] : memref<1x32xf32, #tpu.memory_space<vmem>>, vector<1x32xf32>
    %53 = arith.truncf %25 : vector<128x32xf32> to vector<128x32xbf16>
    %cst_21 = arith.constant dense<0.000000e+00> : vector<128x32xf32>
    %54 = tpu.matmul %53, %51, %cst_21 {dimension_numbers = #tpu.dot_dimension_numbers<[1], [0], [0], [1], [0, 0, 1, 1], [], []>} : vector<128x32xbf16>, vector<32x32xbf16>, vector<128x32xf32> -> vector<128x32xf32>
    %55 = vector.broadcast %52 : vector<1x32xf32> to vector<128x32xf32>
    %56 = arith.addf %54, %55 : vector<128x32xf32>
    %57 = arith.truncf %50 : vector<128x32xf32> to vector<128x32xbf16>
    %cst_22 = arith.constant dense<0.000000e+00> : vector<128x32xf32>
    %58 = tpu.matmul %57, %51, %cst_22 {dimension_numbers = #tpu.dot_dimension_numbers<[1], [0], [0], [1], [0, 0, 1, 1], [], []>} : vector<128x32xbf16>, vector<32x32xbf16>, vector<128x32xf32> -> vector<128x32xf32>
    %59 = vector.broadcast %52 : vector<1x32xf32> to vector<128x32xf32>
    %60 = arith.addf %58, %59 : vector<128x32xf32>
    %61 = arith.truncf %56 : vector<128x32xf32> to vector<128x32xbf16>
    %c0_23 = arith.constant 0 : index
    %c0_24 = arith.constant 0 : index
    %62 = vector.load %arg9[%c0_23, %c0_24] : memref<32x256xbf16, #tpu.memory_space<vmem>>, vector<32x256xbf16>
    %cst_25 = arith.constant dense<0.000000e+00> : vector<128x256xf32>
    %63 = tpu.matmul %61, %62, %cst_25 {dimension_numbers = #tpu.dot_dimension_numbers<[1], [0], [0], [1], [0, 0, 1, 1], [], []>} : vector<128x32xbf16>, vector<32x256xbf16>, vector<128x256xf32> -> vector<128x256xf32>
    %c0_26 = arith.constant 0 : index
    %c0_27 = arith.constant 0 : index
    %64 = vector.load %arg10[%c0_26, %c0_27] : memref<1x256xf32, #tpu.memory_space<vmem>>, vector<1x256xf32>
    %65 = vector.broadcast %64 : vector<1x256xf32> to vector<128x256xf32>
    %66 = arith.addf %63, %65 : vector<128x256xf32>
    %cst_28 = arith.constant 0.000000e+00 : f32
    %67 = vector.broadcast %cst_28 : f32 to vector<128x256xf32>
    %68 = arith.maximumf %66, %67 : vector<128x256xf32>
    %69 = arith.truncf %60 : vector<128x32xf32> to vector<128x32xbf16>
    %c0_29 = arith.constant 0 : index
    %c0_30 = arith.constant 0 : index
    %70 = vector.load %arg7[%c0_29, %c0_30] : memref<32x256xbf16, #tpu.memory_space<vmem>>, vector<32x256xbf16>
    %cst_31 = arith.constant dense<0.000000e+00> : vector<128x256xf32>
    %71 = tpu.matmul %69, %70, %cst_31 {dimension_numbers = #tpu.dot_dimension_numbers<[1], [0], [0], [1], [0, 0, 1, 1], [], []>} : vector<128x32xbf16>, vector<32x256xbf16>, vector<128x256xf32> -> vector<128x256xf32>
    %c0_32 = arith.constant 0 : index
    %c0_33 = arith.constant 0 : index
    %72 = vector.load %arg8[%c0_32, %c0_33] : memref<1x256xf32, #tpu.memory_space<vmem>>, vector<1x256xf32>
    %73 = vector.broadcast %72 : vector<1x256xf32> to vector<128x256xf32>
    %74 = arith.addf %71, %73 : vector<128x256xf32>
    %cst_34 = arith.constant 0.000000e+00 : f32
    %75 = vector.broadcast %cst_34 : f32 to vector<128x256xf32>
    %76 = arith.maximumf %74, %75 : vector<128x256xf32>
    %77 = arith.truncf %76 : vector<128x256xf32> to vector<128x256xbf16>
    %c0_35 = arith.constant 0 : index
    %c0_36 = arith.constant 0 : index
    %78 = vector.load %arg11[%c0_35, %c0_36] : memref<256x128xbf16, #tpu.memory_space<vmem>>, vector<256x128xbf16>
    %cst_37 = arith.constant dense<0.000000e+00> : vector<128x128xf32>
    %79 = tpu.matmul %77, %78, %cst_37 {dimension_numbers = #tpu.dot_dimension_numbers<[1], [0], [0], [1], [0, 0, 1, 1], [], []>} : vector<128x256xbf16>, vector<256x128xbf16>, vector<128x128xf32> -> vector<128x128xf32>
    %80 = arith.truncf %68 : vector<128x256xf32> to vector<128x256xbf16>
    %c0_38 = arith.constant 0 : index
    %c0_39 = arith.constant 0 : index
    %81 = vector.load %arg12[%c0_38, %c0_39] : memref<256x128xbf16, #tpu.memory_space<vmem>>, vector<256x128xbf16>
    %cst_40 = arith.constant dense<0.000000e+00> : vector<128x128xf32>
    %82 = tpu.matmul %80, %81, %cst_40 {dimension_numbers = #tpu.dot_dimension_numbers<[1], [0], [0], [1], [0, 0, 1, 1], [], []>} : vector<128x256xbf16>, vector<256x128xbf16>, vector<128x128xf32> -> vector<128x128xf32>
    %83 = arith.addf %79, %82 : vector<128x128xf32>
    %c0_41 = arith.constant 0 : index
    %c0_42 = arith.constant 0 : index
    %84 = vector.load %arg13[%c0_41, %c0_42] : memref<1x128xf32, #tpu.memory_space<vmem>>, vector<1x128xf32>
    %85 = vector.broadcast %84 : vector<1x128xf32> to vector<128x128xf32>
    %86 = arith.addf %83, %85 : vector<128x128xf32>
    %c0_43 = arith.constant 0 : index
    %c0_44 = arith.constant 0 : index
    %87 = vector.load %arg14[%c0_43, %c0_44] : memref<128x128xf32, #tpu.memory_space<vmem>>, vector<128x128xf32>
    tpu.vector_store %arg14[%c0_43, %c0_44], %86 {strides = array<i32>} : memref<128x128xf32, #tpu.memory_space<vmem>>, vector<128x128xf32>,
    return
  }
  func.func @transform_0(%arg0: i32) -> (i32, i32) {
    %c0_i32 = arith.constant 0 : i32
    %c0_i32_0 = arith.constant 0 : i32
    return %arg0, %c0_i32 : i32, i32
  }
  func.func @transform_1(%arg0: i32) -> (i32, i32) {
    %c0_i32 = arith.constant 0 : i32
    %c0_i32_0 = arith.constant 0 : i32
    return %arg0, %c0_i32 : i32, i32
  }
  func.func @transform_2(%arg0: i32) -> (i32, i32) {
    %c0_i32 = arith.constant 0 : i32
    %c0_i32_0 = arith.constant 0 : i32
    %c0_i32_1 = arith.constant 0 : i32
    return %c0_i32, %c0_i32_0 : i32, i32
  }
  func.func @transform_3(%arg0: i32) -> (i32, i32) {
    %c0_i32 = arith.constant 0 : i32
    %c0_i32_0 = arith.constant 0 : i32
    %c0_i32_1 = arith.constant 0 : i32
    return %c0_i32, %c0_i32_0 : i32, i32
  }
  func.func @transform_4(%arg0: i32) -> (i32, i32) {
    %c0_i32 = arith.constant 0 : i32
    %c0_i32_0 = arith.constant 0 : i32
    %c0_i32_1 = arith.constant 0 : i32
    return %c0_i32, %c0_i32_0 : i32, i32
  }
  func.func @transform_5(%arg0: i32) -> (i32, i32) {
    %c0_i32 = arith.constant 0 : i32
    %c0_i32_0 = arith.constant 0 : i32
    %c0_i32_1 = arith.constant 0 : i32
    return %c0_i32, %c0_i32_0 : i32, i32
  }
  func.func @transform_6(%arg0: i32) -> (i32, i32) {
    %c0_i32 = arith.constant 0 : i32
    %c0_i32_0 = arith.constant 0 : i32
    %c0_i32_1 = arith.constant 0 : i32
    return %c0_i32, %c0_i32_0 : i32, i32
  }
  func.func @transform_7(%arg0: i32) -> (i32, i32) {
    %c0_i32 = arith.constant 0 : i32
    %c0_i32_0 = arith.constant 0 : i32
    %c0_i32_1 = arith.constant 0 : i32
    return %c0_i32, %c0_i32_0 : i32, i32
  }
  func.func @transform_8(%arg0: i32) -> (i32, i32) {
    %c0_i32 = arith.constant 0 : i32
    %c0_i32_0 = arith.constant 0 : i32
    %c0_i32_1 = arith.constant 0 : i32
    return %c0_i32, %c0_i32_0 : i32, i32
  }
  func.func @transform_9(%arg0: i32) -> (i32, i32) {
    %c0_i32 = arith.constant 0 : i32
    %c0_i32_0 = arith.constant 0 : i32
    %c0_i32_1 = arith.constant 0 : i32
    return %c0_i32, %c0_i32_0 : i32, i32
  }
  func.func @transform_10(%arg0: i32) -> (i32, i32) {
    %c0_i32 = arith.constant 0 : i32
    %c0_i32_0 = arith.constant 0 : i32
    %c0_i32_1 = arith.constant 0 : i32
    return %c0_i32, %c0_i32_0 : i32, i32
  }
  func.func @transform_11(%arg0: i32) -> (i32, i32) {
    %c0_i32 = arith.constant 0 : i32
    %c0_i32_0 = arith.constant 0 : i32
    %c0_i32_1 = arith.constant 0 : i32
    return %c0_i32, %c0_i32_0 : i32, i32
  }
  func.func @transform_12(%arg0: i32) -> (i32, i32) {
    %c0_i32 = arith.constant 0 : i32
    %c0_i32_0 = arith.constant 0 : i32
    %c0_i32_1 = arith.constant 0 : i32
    return %c0_i32, %c0_i32_0 : i32, i32
  }
  func.func @transform_13(%arg0: i32) -> (i32, i32) {
    %c0_i32 = arith.constant 0 : i32
    %c0_i32_0 = arith.constant 0 : i32
    return %arg0, %c0_i32 : i32, i32
  }
}

</mosaic_0001>

<llo_original>
// kernel: pair_predictor_forward.1
$region0: #{pair_predictor_forward.1}
  #allocation0 [shape = 'u32[]', space=smem, size = 0x4, offset = 0x4, fixed_abs, tag = 'smem constant byte address 0x4 - core index']
  #allocation1 [shape = 'u32[144,128]{1,0:T(1,128)}', space=vmem, size = 0x12000, scoped, tag = 'internal scratch']
  %s0 = inlined_call_operand.vmem [shape: f32[128,32], index: 0, kind: input, shape index: {}]
  %s1 = inlined_call_operand.vmem [shape: f32[128,32], index: 1, kind: input, shape index: {}]
  %s2 = inlined_call_operand.vmem [shape: f32[1,32], index: 2, kind: input, shape index: {}]
  %s3 = inlined_call_operand.vmem [shape: f32[1,32], index: 3, kind: input, shape index: {}]
  %s4 = inlined_call_operand.vmem [shape: bf16[32,32], index: 4, kind: input, shape index: {}]
  %s5 = inlined_call_operand.vmem [shape: f32[1,32], index: 5, kind: input, shape index: {}]
  %s6 = inlined_call_operand.vmem [shape: bf16[32,256], index: 6, kind: input, shape index: {}]
  %s7 = inlined_call_operand.vmem [shape: f32[1,256], index: 7, kind: input, shape index: {}]
  %s8 = inlined_call_operand.vmem [shape: bf16[32,256], index: 8, kind: input, shape index: {}]
  %s9 = inlined_call_operand.vmem [shape: f32[1,256], index: 9, kind: input, shape index: {}]
  %s10 = inlined_call_operand.vmem [shape: bf16[256,128], index: 10, kind: input, shape index: {}]
  %s11 = inlined_call_operand.vmem [shape: bf16[256,128], index: 11, kind: input, shape index: {}]
  %s12 = inlined_call_operand.vmem [shape: f32[1,128], index: 12, kind: input, shape index: {}]
  %s13 = inlined_call_operand.vmem [shape: f32[128,128], index: 13, kind: output, shape index: {}]
  %s14 = sld [smem:[#allocation0]]
  $region62: #{pair_predictor_forward.1} parent=0
    _
  %s16 = ssub.s32 1, %s14
  %s17 = scalar_select 0, %s16, %s14
  // Predicated region
  $region2: #{pair_predictor_forward.1} parent=0 // pred_check
    _
  $region3: #{pair_predictor_forward.1} parent=0 // pred_check_branch
    %19 = sbr.rel (0) target = $region5
  $region4: #{pair_predictor_forward.1} parent=0 // pred_region
    _
  $region5: #{pair_predictor_forward.1} parent=0 // pred_fallthru
    _
  // Predicated region
  $region6: #{pair_predictor_forward.1} parent=0 // pred_check
    _
  $region7: #{pair_predictor_forward.1} parent=0 // pred_check_branch
    %21 = sbr.rel (0) target = $region9
  $region8: #{pair_predictor_forward.1} parent=0 // pred_region
    _
  $region9: #{pair_predictor_forward.1} parent=0 // pred_fallthru
    _
  // Predicated region
  $region10: #{pair_predictor_forward.1} parent=0 // pred_check
    _
  $region11: #{pair_predictor_forward.1} parent=0 // pred_check_branch
    %23 = sbr.rel (0) target = $region13
  $region12: #{pair_predictor_forward.1} parent=0 // pred_region
    _
  $region13: #{pair_predictor_forward.1} parent=0 // pred_fallthru
    _
  // Predicated region
  $region14: #{pair_predictor_forward.1} parent=0 // pred_check
    _
  $region15: #{pair_predictor_forward.1} parent=0 // pred_check_branch
    %25 = sbr.rel (0) target = $region17
  $region16: #{pair_predictor_forward.1} parent=0 // pred_region
    _
  $region17: #{pair_predictor_forward.1} parent=0 // pred_fallthru
    _
  // Predicated region
  $region18: #{pair_predictor_forward.1} parent=0 // pred_check
    _
  $region19: #{pair_predictor_forward.1} parent=0 // pred_check_branch
    %27 = sbr.rel (0) target = $region21
  $region20: #{pair_predictor_forward.1} parent=0 // pred_region
    _
  $region21: #{pair_predictor_forward.1} parent=0 // pred_fallthru
    _
  // Predicated region
  $region22: #{pair_predictor_forward.1} parent=0 // pred_check
    _
  $region23: #{pair_predictor_forward.1} parent=0 // pred_check_branch
    %29 = sbr.rel (0) target = $region25
  $region24: #{pair_predictor_forward.1} parent=0 // pred_region
    _
  $region25: #{pair_predictor_forward.1} parent=0 // pred_fallthru
    _
  // Predicated region
  $region26: #{pair_predictor_forward.1} parent=0 // pred_check
    _
  $region27: #{pair_predictor_forward.1} parent=0 // pred_check_branch
    %31 = sbr.rel (0) target = $region29
  $region28: #{pair_predictor_forward.1} parent=0 // pred_region
    _
  $region29: #{pair_predictor_forward.1} parent=0 // pred_fallthru
    _
  // Predicated region
  $region30: #{pair_predictor_forward.1} parent=0 // pred_check
    _
  $region31: #{pair_predictor_forward.1} parent=0 // pred_check_branch
    %33 = sbr.rel (0) target = $region33
  $region32: #{pair_predictor_forward.1} parent=0 // pred_region
    _
  $region33: #{pair_predictor_forward.1} parent=0 // pred_fallthru
    _
  // Predicated region
  $region34: #{pair_predictor_forward.1} parent=0 // pred_check
    _
  $region35: #{pair_predictor_forward.1} parent=0 // pred_check_branch
    %35 = sbr.rel (0) target = $region37
  $region36: #{pair_predictor_forward.1} parent=0 // pred_region
    _
  $region37: #{pair_predictor_forward.1} parent=0 // pred_fallthru
    _
  // Predicated region
  $region38: #{pair_predictor_forward.1} parent=0 // pred_check
    _
  $region39: #{pair_predictor_forward.1} parent=0 // pred_check_branch
    %37 = sbr.rel (0) target = $region41
  $region40: #{pair_predictor_forward.1} parent=0 // pred_region
    _
  $region41: #{pair_predictor_forward.1} parent=0 // pred_fallthru
    _
  // Predicated region
  $region42: #{pair_predictor_forward.1} parent=0 // pred_check
    _
  $region43: #{pair_predictor_forward.1} parent=0 // pred_check_branch
    %39 = sbr.rel (0) target = $region45
  $region44: #{pair_predictor_forward.1} parent=0 // pred_region
    _
  $region45: #{pair_predictor_forward.1} parent=0 // pred_fallthru
    _
  // Predicated region
  $region46: #{pair_predictor_forward.1} parent=0 // pred_check
    _
  $region47: #{pair_predictor_forward.1} parent=0 // pred_check_branch
    %41 = sbr.rel (0) target = $region49
  $region48: #{pair_predictor_forward.1} parent=0 // pred_region
    _
  $region49: #{pair_predictor_forward.1} parent=0 // pred_fallthru
    _
  // Predicated region
  $region50: #{pair_predictor_forward.1} parent=0 // pred_check
    _
  $region51: #{pair_predictor_forward.1} parent=0 // pred_check_branch
    %43 = sbr.rel (0) target = $region53
  $region52: #{pair_predictor_forward.1} parent=0 // pred_region
    _
  $region53: #{pair_predictor_forward.1} parent=0 // pred_fallthru
    _
  %v45 = vld [vmem:[%s0] sm:$0xff]
  %v46 = vld [vmem:[%s0 + $0x8] sm:$0xff]
  %v47 = vld [vmem:[%s0 + $0x10] sm:$0xff]
  %v48 = vld [vmem:[%s0 + $0x18] sm:$0xff]
  %v49 = vld [vmem:[%s0 + $0x20] sm:$0xff]
  %v50 = vld [vmem:[%s0 + $0x28] sm:$0xff]
  %v51 = vld [vmem:[%s0 + $0x30] sm:$0xff]
  %v52 = vld [vmem:[%s0 + $0x38] sm:$0xff]
  %v53 = vld [vmem:[%s0 + $0x40] sm:$0xff]
  %v54 = vld [vmem:[%s0 + $0x48] sm:$0xff]
  %v55 = vld [vmem:[%s0 + $0x50] sm:$0xff]
  %v56 = vld [vmem:[%s0 + $0x58] sm:$0xff]
  %v57 = vld [vmem:[%s0 + $0x60] sm:$0xff]
  %v58 = vld [vmem:[%s0 + $0x68] sm:$0xff]
  %v59 = vld [vmem:[%s0 + $0x70] sm:$0xff]
  %v60 = vld [vmem:[%s0 + $0x78] sm:$0xff]
  %v61 = vld [vmem:[%s1] sm:$0xff]
  %v62 = vld [vmem:[%s1 + $0x8] sm:$0xff]
  %v63 = vld [vmem:[%s1 + $0x10] sm:$0xff]
  %v64 = vld [vmem:[%s1 + $0x18] sm:$0xff]
  %v65 = vld [vmem:[%s1 + $0x20] sm:$0xff]
  %v66 = vld [vmem:[%s1 + $0x28] sm:$0xff]
  %v67 = vld [vmem:[%s1 + $0x30] sm:$0xff]
  %v68 = vld [vmem:[%s1 + $0x38] sm:$0xff]
  %v69 = vld [vmem:[%s1 + $0x40] sm:$0xff]
  %v70 = vld [vmem:[%s1 + $0x48] sm:$0xff]
  %v71 = vld [vmem:[%s1 + $0x50] sm:$0xff]
  %v72 = vld [vmem:[%s1 + $0x58] sm:$0xff]
  %v73 = vld [vmem:[%s1 + $0x60] sm:$0xff]
  %v74 = vld [vmem:[%s1 + $0x68] sm:$0xff]
  %v75 = vld [vmem:[%s1 + $0x70] sm:$0xff]
  %v76 = vld [vmem:[%s1 + $0x78] sm:$0xff]
  %v77 = vld [vmem:[%s2] sm:$0x1]
  %v78 = vld [vmem:[%s3] sm:$0x1]
  %vm79 = vcmask 261120
  %v80 = vsel %vm79, %v45, 0.0
  %81 = vadd.xlane.f32.xlu0 %v80
  %v82 = vpop.xlane.xlu0 %81
  %v83 = vsel %vm79, %v46, 0.0
  %84 = vadd.xlane.f32.xlu0 %v83
  %v85 = vpop.xlane.xlu0 %84
  %v86 = vsel %vm79, %v47, 0.0
  %87 = vadd.xlane.f32.xlu0 %v86
  %v88 = vpop.xlane.xlu0 %87
  %v89 = vsel %vm79, %v48, 0.0
  %90 = vadd.xlane.f32.xlu0 %v89
  %v91 = vpop.xlane.xlu0 %90
  %v92 = vsel %vm79, %v49, 0.0
  %93 = vadd.xlane.f32.xlu0 %v92
  %v94 = vpop.xlane.xlu0 %93
  %v95 = vsel %vm79, %v50, 0.0
  %96 = vadd.xlane.f32.xlu0 %v95
  %v97 = vpop.xlane.xlu0 %96
  %v98 = vsel %vm79, %v51, 0.0
  %99 = vadd.xlane.f32.xlu0 %v98
  %v100 = vpop.xlane.xlu0 %99
  %v101 = vsel %vm79, %v52, 0.0
  %102 = vadd.xlane.f32.xlu0 %v101
  %v103 = vpop.xlane.xlu0 %102
  %v104 = vsel %vm79, %v53, 0.0
  %105 = vadd.xlane.f32.xlu0 %v104
  %v106 = vpop.xlane.xlu0 %105
  %v107 = vsel %vm79, %v54, 0.0
  %108 = vadd.xlane.f32.xlu0 %v107
  %v109 = vpop.xlane.xlu0 %108
  %v110 = vsel %vm79, %v55, 0.0
  %111 = vadd.xlane.f32.xlu0 %v110
  %v112 = vpop.xlane.xlu0 %111
  %v113 = vsel %vm79, %v56, 0.0
  %114 = vadd.xlane.f32.xlu0 %v113
  %v115 = vpop.xlane.xlu0 %114
  %v116 = vsel %vm79, %v57, 0.0
  %117 = vadd.xlane.f32.xlu0 %v116
  %v118 = vpop.xlane.xlu0 %117
  %v119 = vsel %vm79, %v58, 0.0
  %120 = vadd.xlane.f32.xlu0 %v119
  %v121 = vpop.xlane.xlu0 %120
  %v122 = vsel %vm79, %v59, 0.0
  %123 = vadd.xlane.f32.xlu0 %v122
  %v124 = vpop.xlane.xlu0 %123
  %v125 = vsel %vm79, %v60, 0.0
  %126 = vadd.xlane.f32.xlu0 %v125
  %v127 = vpop.xlane.xlu0 %126
  %v128 = vrcp.pop 32.0
  %v129 = vmul.f32 %v82, %v128
  %v130 = vmul.f32 %v85, %v128
  %v131 = vmul.f32 %v88, %v128
  %v132 = vmul.f32 %v91, %v128
  %v133 = vmul.f32 %v94, %v128
  %v134 = vmul.f32 %v97, %v128
  %v135 = vmul.f32 %v100, %v128
  %v136 = vmul.f32 %v103, %v128
  %v137 = vmul.f32 %v106, %v128
  %v138 = vmul.f32 %v109, %v128
  %v139 = vmul.f32 %v112, %v128
  %v140 = vmul.f32 %v115, %v128
  %v141 = vmul.f32 %v118, %v128
  %v142 = vmul.f32 %v121, %v128
  %v143 = vmul.f32 %v124, %v128
  %v144 = vmul.f32 %v127, %v128
  %v145 = vsub.f32 %v45, %v129
  %v146 = vsub.f32 %v46, %v130
  %v147 = vsub.f32 %v47, %v131
  %v148 = vsub.f32 %v48, %v132
  %v149 = vsub.f32 %v49, %v133
  %v150 = vsub.f32 %v50, %v134
  %v151 = vsub.f32 %v51, %v135
  %v152 = vsub.f32 %v52, %v136
  %v153 = vsub.f32 %v53, %v137
  %v154 = vsub.f32 %v54, %v138
  %v155 = vsub.f32 %v55, %v139
  %v156 = vsub.f32 %v56, %v140
  %v157 = vsub.f32 %v57, %v141
  %v158 = vsub.f32 %v58, %v142
  %v159 = vsub.f32 %v59, %v143
  %v160 = vsub.f32 %v60, %v144
  %v161 = vmul.f32 %v145, %v145
  %v162 = vmul.f32 %v146, %v146
  %v163 = vmul.f32 %v147, %v147
  %v164 = vmul.f32 %v148, %v148
  %v165 = vmul.f32 %v149, %v149
  %v166 = vmul.f32 %v150, %v150
  %v167 = vmul.f32 %v151, %v151
  %v168 = vmul.f32 %v152, %v152
  %v169 = vmul.f32 %v153, %v153
  %v170 = vmul.f32 %v154, %v154
  %v171 = vmul.f32 %v155, %v155
  %v172 = vmul.f32 %v156, %v156
  %v173 = vmul.f32 %v157, %v157
  %v174 = vmul.f32 %v158, %v158
  %v175 = vmul.f32 %v159, %v159
  %v176 = vmul.f32 %v160, %v160
  %v177 = vsel %vm79, %v161, 0.0
  %178 = vadd.xlane.f32.xlu0 %v177
  %v179 = vpop.xlane.xlu0 %178
  %v180 = vsel %vm79, %v162, 0.0
  %181 = vadd.xlane.f32.xlu0 %v180
  %v182 = vpop.xlane.xlu0 %181
  %v183 = vsel %vm79, %v163, 0.0
  %184 = vadd.xlane.f32.xlu0 %v183
  %v185 = vpop.xlane.xlu0 %184
  %v186 = vsel %vm79, %v164, 0.0
  %187 = vadd.xlane.f32.xlu0 %v186
  %v188 = vpop.xlane.xlu0 %187
  %v189 = vsel %vm79, %v165, 0.0
  %190 = vadd.xlane.f32.xlu0 %v189
  %v191 = vpop.xlane.xlu0 %190
  %v192 = vsel %vm79, %v166, 0.0
  %193 = vadd.xlane.f32.xlu0 %v192
  %v194 = vpop.xlane.xlu0 %193
  %v195 = vsel %vm79, %v167, 0.0
  %196 = vadd.xlane.f32.xlu0 %v195
  %v197 = vpop.xlane.xlu0 %196
  %v198 = vsel %vm79, %v168, 0.0
  %199 = vadd.xlane.f32.xlu0 %v198
  %v200 = vpop.xlane.xlu0 %199
  %v201 = vsel %vm79, %v169, 0.0
  %202 = vadd.xlane.f32.xlu0 %v201
  %v203 = vpop.xlane.xlu0 %202
  %v204 = vsel %vm79, %v170, 0.0
  %205 = vadd.xlane.f32.xlu0 %v204
  %v206 = vpop.xlane.xlu0 %205
  %v207 = vsel %vm79, %v171, 0.0
  %208 = vadd.xlane.f32.xlu0 %v207
  %v209 = vpop.xlane.xlu0 %208
  %v210 = vsel %vm79, %v172, 0.0
  %211 = vadd.xlane.f32.xlu0 %v210
  %v212 = vpop.xlane.xlu0 %211
  %v213 = vsel %vm79, %v173, 0.0
  %214 = vadd.xlane.f32.xlu0 %v213
  %v215 = vpop.xlane.xlu0 %214
  %v216 = vsel %vm79, %v174, 0.0
  %217 = vadd.xlane.f32.xlu0 %v216
  %v218 = vpop.xlane.xlu0 %217
  %v219 = vsel %vm79, %v175, 0.0
  %220 = vadd.xlane.f32.xlu0 %v219
  %v221 = vpop.xlane.xlu0 %220
  %v222 = vsel %vm79, %v176, 0.0
  %223 = vadd.xlane.f32.xlu0 %v222
  %v224 = vpop.xlane.xlu0 %223
  %v225 = vmul.f32 %v179, %v128
  %v226 = vmul.f32 %v182, %v128
  %v227 = vmul.f32 %v185, %v128
  %v228 = vmul.f32 %v188, %v128
  %v229 = vmul.f32 %v191, %v128
  %v230 = vmul.f32 %v194, %v128
  %v231 = vmul.f32 %v197, %v128
  %v232 = vmul.f32 %v200, %v128
  %v233 = vmul.f32 %v203, %v128
  %v234 = vmul.f32 %v206, %v128
  %v235 = vmul.f32 %v209, %v128
  %v236 = vmul.f32 %v212, %v128
  %v237 = vmul.f32 %v215, %v128
  %v238 = vmul.f32 %v218, %v128
  %v239 = vmul.f32 %v221, %v128
  %v240 = vmul.f32 %v224, %v128
  %v242 = vlaneseq
  %v243 = vshrl.u32 %v242, 7
  %v244 = vsub.s32 0, %v243
  %v245 = vrot.slane %v77, %v244
  %v247 = vmul.f32 %v245, %v145
  %v248 = vmul.f32 %v245, %v146
  %v249 = vmul.f32 %v245, %v147
  %v250 = vmul.f32 %v245, %v148
  %v251 = vmul.f32 %v245, %v149
  %v252 = vmul.f32 %v245, %v150
  %v253 = vmul.f32 %v245, %v151
  %v254 = vmul.f32 %v245, %v152
  %v255 = vmul.f32 %v245, %v153
  %v256 = vmul.f32 %v245, %v154
  %v257 = vmul.f32 %v245, %v155
  %v258 = vmul.f32 %v245, %v156
  %v259 = vmul.f32 %v245, %v157
  %v260 = vmul.f32 %v245, %v158
  %v261 = vmul.f32 %v245, %v159
  %v262 = vmul.f32 %v245, %v160
  %v263 = vadd.f32 %v225, 1e-05
  %v264 = vadd.f32 %v226, 1e-05
  %v265 = vadd.f32 %v227, 1e-05
  %v266 = vadd.f32 %v228, 1e-05
  %v267 = vadd.f32 %v229, 1e-05
  %v268 = vadd.f32 %v230, 1e-05
  %v269 = vadd.f32 %v231, 1e-05
  %v270 = vadd.f32 %v232, 1e-05
  %v271 = vadd.f32 %v233, 1e-05
  %v272 = vadd.f32 %v234, 1e-05
  %v273 = vadd.f32 %v235, 1e-05
  %v274 = vadd.f32 %v236, 1e-05
  %v275 = vadd.f32 %v237, 1e-05
  %v276 = vadd.f32 %v238, 1e-05
  %v277 = vadd.f32 %v239, 1e-05
  %v278 = vadd.f32 %v240, 1e-05
  %v279 = vrsqrt.pop %v263
  %v280 = vrsqrt.pop %v264
  %v281 = vrsqrt.pop %v265
  %v282 = vrsqrt.pop %v266
  %v283 = vrsqrt.pop %v267
  %v284 = vrsqrt.pop %v268
  %v285 = vrsqrt.pop %v269
  %v286 = vrsqrt.pop %v270
  %v287 = vrsqrt.pop %v271
  %v288 = vrsqrt.pop %v272
  %v289 = vrsqrt.pop %v273
  %v290 = vrsqrt.pop %v274
  %v291 = vrsqrt.pop %v275
  %v292 = vrsqrt.pop %v276
  %v293 = vrsqrt.pop %v277
  %v294 = vrsqrt.pop %v278
  %v295 = vmul.f32 %v247, %v279
  %v296 = vmul.f32 %v248, %v280
  %v297 = vmul.f32 %v249, %v281
  %v298 = vmul.f32 %v250, %v282
  %v299 = vmul.f32 %v251, %v283
  %v300 = vmul.f32 %v252, %v284
  %v301 = vmul.f32 %v253, %v285
  %v302 = vmul.f32 %v254, %v286
  %v303 = vmul.f32 %v255, %v287
  %v304 = vmul.f32 %v256, %v288
  %v305 = vmul.f32 %v257, %v289
  %v306 = vmul.f32 %v258, %v290
  %v307 = vmul.f32 %v259, %v291
  %v308 = vmul.f32 %v260, %v292
  %v309 = vmul.f32 %v261, %v293
  %v310 = vmul.f32 %v262, %v294
  %v312 = vlaneseq
  %v313 = vshrl.u32 %v312, 7
  %v314 = vsub.s32 0, %v313
  %v315 = vrot.slane %v78, %v314
  %v317 = vadd.f32 %v295, %v315
  %v318 = vadd.f32 %v296, %v315
  %v319 = vadd.f32 %v297, %v315
  %v320 = vadd.f32 %v298, %v315
  %v321 = vadd.f32 %v299, %v315
  %v322 = vadd.f32 %v300, %v315
  %v323 = vadd.f32 %v301, %v315
  %v324 = vadd.f32 %v302, %v315
  %v325 = vadd.f32 %v303, %v315
  %v326 = vadd.f32 %v304, %v315
  %v327 = vadd.f32 %v305, %v315
  %v328 = vadd.f32 %v306, %v315
  %v329 = vadd.f32 %v307, %v315
  %v330 = vadd.f32 %v308, %v315
  %v331 = vadd.f32 %v309, %v315
  %v332 = vadd.f32 %v310, %v315
  %v333 = vsel %vm79, %v61, 0.0
  %334 = vadd.xlane.f32.xlu0 %v333
  %v335 = vpop.xlane.xlu0 %334
  %v336 = vsel %vm79, %v62, 0.0
  %337 = vadd.xlane.f32.xlu0 %v336
  %v338 = vpop.xlane.xlu0 %337
  %v339 = vsel %vm79, %v63, 0.0
  %340 = vadd.xlane.f32.xlu0 %v339
  %v341 = vpop.xlane.xlu0 %340
  %v342 = vsel %vm79, %v64, 0.0
  %343 = vadd.xlane.f32.xlu0 %v342
  %v344 = vpop.xlane.xlu0 %343
  %v345 = vsel %vm79, %v65, 0.0
  %346 = vadd.xlane.f32.xlu0 %v345
  %v347 = vpop.xlane.xlu0 %346
  %v348 = vsel %vm79, %v66, 0.0
  %349 = vadd.xlane.f32.xlu0 %v348
  %v350 = vpop.xlane.xlu0 %349
  %v351 = vsel %vm79, %v67, 0.0
  %352 = vadd.xlane.f32.xlu0 %v351
  %v353 = vpop.xlane.xlu0 %352
  %v354 = vsel %vm79, %v68, 0.0
  %355 = vadd.xlane.f32.xlu0 %v354
  %v356 = vpop.xlane.xlu0 %355
  %v357 = vsel %vm79, %v69, 0.0
  %358 = vadd.xlane.f32.xlu0 %v357
  %v359 = vpop.xlane.xlu0 %358
  %v360 = vsel %vm79, %v70, 0.0
  %361 = vadd.xlane.f32.xlu0 %v360
  %v362 = vpop.xlane.xlu0 %361
  %v363 = vsel %vm79, %v71, 0.0
  %364 = vadd.xlane.f32.xlu0 %v363
  %v365 = vpop.xlane.xlu0 %364
  %v366 = vsel %vm79, %v72, 0.0
  %367 = vadd.xlane.f32.xlu0 %v366
  %v368 = vpop.xlane.xlu0 %367
  %v369 = vsel %vm79, %v73, 0.0
  %370 = vadd.xlane.f32.xlu0 %v369
  %v371 = vpop.xlane.xlu0 %370
  %v372 = vsel %vm79, %v74, 0.0
  %373 = vadd.xlane.f32.xlu0 %v372
  %v374 = vpop.xlane.xlu0 %373
  %v375 = vsel %vm79, %v75, 0.0
  %376 = vadd.xlane.f32.xlu0 %v375
  %v377 = vpop.xlane.xlu0 %376
  %v378 = vsel %vm79, %v76, 0.0
  %379 = vadd.xlane.f32.xlu0 %v378
  %v380 = vpop.xlane.xlu0 %379
  %v381 = vmul.f32 %v335, %v128
  %v382 = vmul.f32 %v338, %v128
  %v383 = vmul.f32 %v341, %v128
  %v384 = vmul.f32 %v344, %v128
  %v385 = vmul.f32 %v347, %v128
  %v386 = vmul.f32 %v350, %v128
  %v387 = vmul.f32 %v353, %v128
  %v388 = vmul.f32 %v356, %v128
  %v389 = vmul.f32 %v359, %v128
  %v390 = vmul.f32 %v362, %v128
  %v391 = vmul.f32 %v365, %v128
  %v392 = vmul.f32 %v368, %v128
  %v393 = vmul.f32 %v371, %v128
  %v394 = vmul.f32 %v374, %v128
  %v395 = vmul.f32 %v377, %v128
  %v396 = vmul.f32 %v380, %v128
  %v397 = vsub.f32 %v61, %v381
  %v398 = vsub.f32 %v62, %v382
  %v399 = vsub.f32 %v63, %v383
  %v400 = vsub.f32 %v64, %v384
  %v401 = vsub.f32 %v65, %v385
  %v402 = vsub.f32 %v66, %v386
  %v403 = vsub.f32 %v67, %v387
  %v404 = vsub.f32 %v68, %v388
  %v405 = vsub.f32 %v69, %v389
  %v406 = vsub.f32 %v70, %v390
  %v407 = vsub.f32 %v71, %v391
  %v408 = vsub.f32 %v72, %v392
  %v409 = vsub.f32 %v73, %v393
  %v410 = vsub.f32 %v74, %v394
  %v411 = vsub.f32 %v75, %v395
  %v412 = vsub.f32 %v76, %v396
  %v413 = vmul.f32 %v397, %v397
  %v414 = vmul.f32 %v398, %v398
  %v415 = vmul.f32 %v399, %v399
  %v416 = vmul.f32 %v400, %v400
  %v417 = vmul.f32 %v401, %v401
  %v418 = vmul.f32 %v402, %v402
  %v419 = vmul.f32 %v403, %v403
  %v420 = vmul.f32 %v404, %v404
  %v421 = vmul.f32 %v405, %v405
  %v422 = vmul.f32 %v406, %v406
  %v423 = vmul.f32 %v407, %v407
  %v424 = vmul.f32 %v408, %v408
  %v425 = vmul.f32 %v409, %v409
  %v426 = vmul.f32 %v410, %v410
  %v427 = vmul.f32 %v411, %v411
  %v428 = vmul.f32 %v412, %v412
  %v429 = vsel %vm79, %v413, 0.0
  %430 = vadd.xlane.f32.xlu0 %v429
  %v431 = vpop.xlane.xlu0 %430
  %v432 = vsel %vm79, %v414, 0.0
  %433 = vadd.xlane.f32.xlu0 %v432
  %v434 = vpop.xlane.xlu0 %433
  %v435 = vsel %vm79, %v415, 0.0
  %436 = vadd.xlane.f32.xlu0 %v435
  %v437 = vpop.xlane.xlu0 %436
  %v438 = vsel %vm79, %v416, 0.0
  %439 = vadd.xlane.f32.xlu0 %v438
  %v440 = vpop.xlane.xlu0 %439
  %v441 = vsel %vm79, %v417, 0.0
  %442 = vadd.xlane.f32.xlu0 %v441
  %v443 = vpop.xlane.xlu0 %442
  %v444 = vsel %vm79, %v418, 0.0
  %445 = vadd.xlane.f32.xlu0 %v444
  %v446 = vpop.xlane.xlu0 %445
  %v447 = vsel %vm79, %v419, 0.0
  %448 = vadd.xlane.f32.xlu0 %v447
  %v449 = vpop.xlane.xlu0 %448
  %v450 = vsel %vm79, %v420, 0.0
  %451 = vadd.xlane.f32.xlu0 %v450
  %v452 = vpop.xlane.xlu0 %451
  %v453 = vsel %vm79, %v421, 0.0
  %454 = vadd.xlane.f32.xlu0 %v453
  %v455 = vpop.xlane.xlu0 %454
  %v456 = vsel %vm79, %v422, 0.0
  %457 = vadd.xlane.f32.xlu0 %v456
  %v458 = vpop.xlane.xlu0 %457
  %v459 = vsel %vm79, %v423, 0.0
  %460 = vadd.xlane.f32.xlu0 %v459
  %v461 = vpop.xlane.xlu0 %460
  %v462 = vsel %vm79, %v424, 0.0
  %463 = vadd.xlane.f32.xlu0 %v462
  %v464 = vpop.xlane.xlu0 %463
  %v465 = vsel %vm79, %v425, 0.0
  %466 = vadd.xlane.f32.xlu0 %v465
  %v467 = vpop.xlane.xlu0 %466
  %v468 = vsel %vm79, %v426, 0.0
  %469 = vadd.xlane.f32.xlu0 %v468
  %v470 = vpop.xlane.xlu0 %469
  %v471 = vsel %vm79, %v427, 0.0
  %472 = vadd.xlane.f32.xlu0 %v471
  %v473 = vpop.xlane.xlu0 %472
  %v474 = vsel %vm79, %v428, 0.0
  %475 = vadd.xlane.f32.xlu0 %v474
  %v476 = vpop.xlane.xlu0 %475
  %v477 = vmul.f32 %v431, %v128
  %v478 = vmul.f32 %v434, %v128
  %v479 = vmul.f32 %v437, %v128
  %v480 = vmul.f32 %v440, %v128
  %v481 = vmul.f32 %v443, %v128
  %v482 = vmul.f32 %v446, %v128
  %v483 = vmul.f32 %v449, %v128
  %v484 = vmul.f32 %v452, %v128
  %v485 = vmul.f32 %v455, %v128
  %v486 = vmul.f32 %v458, %v128
  %v487 = vmul.f32 %v461, %v128
  %v488 = vmul.f32 %v464, %v128
  %v489 = vmul.f32 %v467, %v128
  %v490 = vmul.f32 %v470, %v128
  %v491 = vmul.f32 %v473, %v128
  %v492 = vmul.f32 %v476, %v128
  %v493 = vmul.f32 %v245, %v397
  %v494 = vmul.f32 %v245, %v398
  %v495 = vmul.f32 %v245, %v399
  %v496 = vmul.f32 %v245, %v400
  %v497 = vmul.f32 %v245, %v401
  %v498 = vmul.f32 %v245, %v402
  %v499 = vmul.f32 %v245, %v403
  %v500 = vmul.f32 %v245, %v404
  %v501 = vmul.f32 %v245, %v405
  %v502 = vmul.f32 %v245, %v406
  %v503 = vmul.f32 %v245, %v407
  %v504 = vmul.f32 %v245, %v408
  %v505 = vmul.f32 %v245, %v409
  %v506 = vmul.f32 %v245, %v410
  %v507 = vmul.f32 %v245, %v411
  %v508 = vmul.f32 %v245, %v412
  %v509 = vadd.f32 %v477, 1e-05
  %v510 = vadd.f32 %v478, 1e-05
  %v511 = vadd.f32 %v479, 1e-05
  %v512 = vadd.f32 %v480, 1e-05
  %v513 = vadd.f32 %v481, 1e-05
  %v514 = vadd.f32 %v482, 1e-05
  %v515 = vadd.f32 %v483, 1e-05
  %v516 = vadd.f32 %v484, 1e-05
  %v517 = vadd.f32 %v485, 1e-05
  %v518 = vadd.f32 %v486, 1e-05
  %v519 = vadd.f32 %v487, 1e-05
  %v520 = vadd.f32 %v488, 1e-05
  %v521 = vadd.f32 %v489, 1e-05
  %v522 = vadd.f32 %v490, 1e-05
  %v523 = vadd.f32 %v491, 1e-05
  %v524 = vadd.f32 %v492, 1e-05
  %v525 = vrsqrt.pop %v509
  %v526 = vrsqrt.pop %v510
  %v527 = vrsqrt.pop %v511
  %v528 = vrsqrt.pop %v512
  %v529 = vrsqrt.pop %v513
  %v530 = vrsqrt.pop %v514
  %v531 = vrsqrt.pop %v515
  %v532 = vrsqrt.pop %v516
  %v533 = vrsqrt.pop %v517
  %v534 = vrsqrt.pop %v518
  %v535 = vrsqrt.pop %v519
  %v536 = vrsqrt.pop %v520
  %v537 = vrsqrt.pop %v521
  %v538 = vrsqrt.pop %v522
  %v539 = vrsqrt.pop %v523
  %v540 = vrsqrt.pop %v524
  %v541 = vmul.f32 %v493, %v525
  %v542 = vmul.f32 %v494, %v526
  %v543 = vmul.f32 %v495, %v527
  %v544 = vmul.f32 %v496, %v528
  %v545 = vmul.f32 %v497, %v529
  %v546 = vmul.f32 %v498, %v530
  %v547 = vmul.f32 %v499, %v531
  %v548 = vmul.f32 %v500, %v532
  %v549 = vmul.f32 %v501, %v533
  %v550 = vmul.f32 %v502, %v534
  %v551 = vmul.f32 %v503, %v535
  %v552 = vmul.f32 %v504, %v536
  %v553 = vmul.f32 %v505, %v537
  %v554 = vmul.f32 %v506, %v538
  %v555 = vmul.f32 %v507, %v539
  %v556 = vmul.f32 %v508, %v540
  %v557 = vadd.f32 %v541, %v315
  %v558 = vadd.f32 %v542, %v315
  %v559 = vadd.f32 %v543, %v315
  %v560 = vadd.f32 %v544, %v315
  %v561 = vadd.f32 %v545, %v315
  %v562 = vadd.f32 %v546, %v315
  %v563 = vadd.f32 %v547, %v315
  %v564 = vadd.f32 %v548, %v315
  %v565 = vadd.f32 %v549, %v315
  %v566 = vadd.f32 %v550, %v315
  %v567 = vadd.f32 %v551, %v315
  %v568 = vadd.f32 %v552, %v315
  %v569 = vadd.f32 %v553, %v315
  %v570 = vadd.f32 %v554, %v315
  %v571 = vadd.f32 %v555, %v315
  %v572 = vadd.f32 %v556, %v315
  %v573 = vadd.f32 %v317, %v557
  %v574 = vadd.f32 %v318, %v558
  %v575 = vadd.f32 %v319, %v559
  %v576 = vadd.f32 %v320, %v560
  %v577 = vadd.f32 %v321, %v561
  %v578 = vadd.f32 %v322, %v562
  %v579 = vadd.f32 %v323, %v563
  %v580 = vadd.f32 %v324, %v564
  %v581 = vadd.f32 %v325, %v565
  %v582 = vadd.f32 %v326, %v566
  %v583 = vadd.f32 %v327, %v567
  %v584 = vadd.f32 %v328, %v568
  %v585 = vadd.f32 %v329, %v569
  %v586 = vadd.f32 %v330, %v570
  %v587 = vadd.f32 %v331, %v571
  %v588 = vadd.f32 %v332, %v572
  %v589 = vmul.f32 %v573, 0.5
  %v590 = vmul.f32 %v574, 0.5
  %v591 = vmul.f32 %v575, 0.5
  %v592 = vmul.f32 %v576, 0.5
  %v593 = vmul.f32 %v577, 0.5
  %v594 = vmul.f32 %v578, 0.5
  %v595 = vmul.f32 %v579, 0.5
  %v596 = vmul.f32 %v580, 0.5
  %v597 = vmul.f32 %v581, 0.5
  %v598 = vmul.f32 %v582, 0.5
  %v599 = vmul.f32 %v583, 0.5
  %v600 = vmul.f32 %v584, 0.5
  %v601 = vmul.f32 %v585, 0.5
  %v602 = vmul.f32 %v586, 0.5
  %v603 = vmul.f32 %v587, 0.5
  %v604 = vmul.f32 %v588, 0.5
  %v605 = vld [vmem:[%s4] sm:$0xf]
  %v606 = vld [vmem:[%s4 + $0x4] sm:$0xf]
  %v607 = vld [vmem:[%s4 + $0x8] sm:$0xf]
  %v608 = vld [vmem:[%s4 + $0xc] sm:$0xf]
  %v609 = vld [vmem:[%s5] sm:$0x1]
  %v610 = vpack.c.bf16 %v318, %v317
  %v611 = vpack.c.bf16 %v320, %v319
  %v612 = vpack.c.bf16 %v322, %v321
  %v613 = vpack.c.bf16 %v324, %v323
  %v614 = vpack.c.bf16 %v326, %v325
  %v615 = vpack.c.bf16 %v328, %v327
  %v616 = vpack.c.bf16 %v330, %v329
  %v617 = vpack.c.bf16 %v332, %v331
  %v619 = vlaneseq
  %v620 = vshrl.u32 %v619, 7
  %v621 = vsub.s32 0, %v620
  %v622 = vrot.slane %v609, %v621
  %v628 = vunpack.c.l.b16 %v605
  %v629 = vunpack.c.l.b16 %v606
  %v630 = vunpack.c.l.b16 %v607
  %v631 = vunpack.c.l.b16 %v608
  %v632 = vpack.c.b16 %v629, %v628
  %v633 = vpack.c.b16 %v631, %v630
  %v637 = vsel %vm79, %v610, 0
  %v640 = vsel %vm79, %v611, 0
  %v643 = vsel %vm79, %v612, 0
  %v646 = vsel %vm79, %v613, 0
  %v649 = vsel %vm79, %v614, 0
  %v652 = vsel %vm79, %v615, 0
  %v655 = vsel %vm79, %v616, 0
  %v658 = vsel %vm79, %v617, 0
  %660 = vmatprep.subr.bf16.mxu0 0
  %661 = vmatpush1.bf16.msra.mxu0 %v632
  %662 = vmatprep.subr.bf16.mxu0 0
  %663 = vmatpush1.bf16.msra.mxu0 %v633
  %664 = vmatprep.subr.bf16.mxu0 0
  %665 = vmatpush1.bf16.msra.mxu0 0
  %666 = vmatprep.subr.bf16.mxu0 0
  %667 = vmatpush1.bf16.msra.mxu0 0
  %668 = vmatprep.subr.bf16.mxu0 0
  %669 = vmatpush1.bf16.msra.mxu0 0
  %670 = vmatprep.subr.bf16.mxu0 0
  %671 = vmatpush1.bf16.msra.mxu0 0
  %672 = vmatprep.subr.bf16.mxu0 0
  %673 = vmatpush1.bf16.msra.mxu0 0
  %674 = vmatprep.subr.bf16.mxu0 0
  %675 = vmatpush1.bf16.msra.mxu0 0
  %676 = vmatprep.subr.bf16.mxu0 0
  %677 = vmatpush1.bf16.msra.mxu0 0
  %678 = vmatprep.subr.bf16.mxu0 0
  %679 = vmatpush1.bf16.msra.mxu0 0
  %680 = vmatprep.subr.bf16.mxu0 0
  %681 = vmatpush1.bf16.msra.mxu0 0
  %682 = vmatprep.subr.bf16.mxu0 0
  %683 = vmatpush1.bf16.msra.mxu0 0
  %684 = vmatprep.subr.bf16.mxu0 0
  %685 = vmatpush1.bf16.msra.mxu0 0
  %686 = vmatprep.subr.bf16.mxu0 0
  %687 = vmatpush1.bf16.msra.mxu0 0
  %688 = vmatprep.subr.bf16.mxu0 0
  %689 = vmatpush1.bf16.msra.mxu0 0
  %690 = vmatprep.subr.bf16.mxu0 0
  %691 = vmatpush1.bf16.msra.mxu0 0
  %692 = vmatprep.mubr.bf16.mxu0 0
  %693 = vmatmul.mubr.bf16.gmra.mrb[0].mxu0 %v637
  %v694 = vpop.f32.mrb[0].mxu0
  %v695 = vadd.f32 %v622, %v694
  %v696 = vpop.f32.mrb[0].mxu0
  %v697 = vpop.f32.mrb[0].mxu0
  %v698 = vadd.f32 %v622, %v697
  %v699 = vpop.f32.mrb[0].mxu0
  %700 = vmatprep.mubr.bf16.mxu0 0
  %701 = vmatmul.mubr.bf16.gmra.mrb[0].mxu0 %v640
  %v702 = vpop.f32.mrb[0].mxu0
  %v703 = vadd.f32 %v622, %v702
  %v704 = vpop.f32.mrb[0].mxu0
  %v705 = vpop.f32.mrb[0].mxu0
  %v706 = vadd.f32 %v622, %v705
  %v707 = vpop.f32.mrb[0].mxu0
  %708 = vmatprep.mubr.bf16.mxu0 0
  %709 = vmatmul.mubr.bf16.gmra.mrb[0].mxu0 %v643
  %v710 = vpop.f32.mrb[0].mxu0
  %v711 = vadd.f32 %v622, %v710
  %v712 = vpop.f32.mrb[0].mxu0
  %v713 = vpop.f32.mrb[0].mxu0
  %v714 = vadd.f32 %v622, %v713
  %v715 = vpop.f32.mrb[0].mxu0
  %716 = vmatprep.mubr.bf16.mxu0 0
  %717 = vmatmul.mubr.bf16.gmra.mrb[0].mxu0 %v646
  %v718 = vpop.f32.mrb[0].mxu0
  %v719 = vadd.f32 %v622, %v718
  %v720 = vpop.f32.mrb[0].mxu0
  %v721 = vpop.f32.mrb[0].mxu0
  %v722 = vadd.f32 %v622, %v721
  %v723 = vpop.f32.mrb[0].mxu0
  %724 = vmatprep.mubr.bf16.mxu0 0
  %725 = vmatmul.mubr.bf16.gmra.mrb[0].mxu0 %v649
  %v726 = vpop.f32.mrb[0].mxu0
  %v727 = vadd.f32 %v622, %v726
  %v728 = vpop.f32.mrb[0].mxu0
  %v729 = vpop.f32.mrb[0].mxu0
  %v730 = vadd.f32 %v622, %v729
  %v731 = vpop.f32.mrb[0].mxu0
  %732 = vmatprep.mubr.bf16.mxu0 0
  %733 = vmatmul.mubr.bf16.gmra.mrb[0].mxu0 %v652
  %v734 = vpop.f32.mrb[0].mxu0
  %v735 = vadd.f32 %v622, %v734
  %v736 = vpop.f32.mrb[0].mxu0
  %v737 = vpop.f32.mrb[0].mxu0
  %v738 = vadd.f32 %v622, %v737
  %v739 = vpop.f32.mrb[0].mxu0
  %740 = vmatprep.mubr.bf16.mxu0 0
  %741 = vmatmul.mubr.bf16.gmra.mrb[0].mxu0 %v655
  %v742 = vpop.f32.mrb[0].mxu0
  %v743 = vadd.f32 %v622, %v742
  %v744 = vpop.f32.mrb[0].mxu0
  %v745 = vpop.f32.mrb[0].mxu0
  %v746 = vadd.f32 %v622, %v745
  %v747 = vpop.f32.mrb[0].mxu0
  %748 = vmatprep.mubr.bf16.mxu0 0
  %749 = vmatmul.mubr.bf16.gmra.mrb[0].mxu0 %v658
  %v750 = vpop.f32.mrb[0].mxu0
  %v751 = vadd.f32 %v622, %v750
  %v752 = vpop.f32.mrb[0].mxu0
  %v753 = vpop.f32.mrb[0].mxu0
  %v754 = vadd.f32 %v622, %v753
  %v755 = vpop.f32.mrb[0].mxu0
  %756 = vdwg.mxu0
  %v757 = vpack.c.bf16 %v590, %v589
  %v758 = vpack.c.bf16 %v592, %v591
  %v759 = vpack.c.bf16 %v594, %v593
  %v760 = vpack.c.bf16 %v596, %v595
  %v761 = vpack.c.bf16 %v598, %v597
  %v762 = vpack.c.bf16 %v600, %v599
  %v763 = vpack.c.bf16 %v602, %v601
  %v764 = vpack.c.bf16 %v604, %v603
  %v766 = vsel %vm79, %v757, 0
  %v769 = vsel %vm79, %v758, 0
  %v772 = vsel %vm79, %v759, 0
  %v775 = vsel %vm79, %v760, 0
  %v778 = vsel %vm79, %v761, 0
  %v781 = vsel %vm79, %v762, 0
  %v784 = vsel %vm79, %v763, 0
  %v787 = vsel %vm79, %v764, 0
  %789 = vmatprep.subr.bf16.mxu0 0
  %790 = vmatpush1.bf16.msra.mxu0 %v632
  %791 = vmatprep.subr.bf16.mxu0 0
  %792 = vmatpush1.bf16.msra.mxu0 %v633
  %793 = vmatprep.subr.bf16.mxu0 0
  %794 = vmatpush1.bf16.msra.mxu0 0
  %795 = vmatprep.subr.bf16.mxu0 0
  %796 = vmatpush1.bf16.msra.mxu0 0
  %797 = vmatprep.subr.bf16.mxu0 0
  %798 = vmatpush1.bf16.msra.mxu0 0
  %799 = vmatprep.subr.bf16.mxu0 0
  %800 = vmatpush1.bf16.msra.mxu0 0
  %801 = vmatprep.subr.bf16.mxu0 0
  %802 = vmatpush1.bf16.msra.mxu0 0
  %803 = vmatprep.subr.bf16.mxu0 0
  %804 = vmatpush1.bf16.msra.mxu0 0
  %805 = vmatprep.subr.bf16.mxu0 0
  %806 = vmatpush1.bf16.msra.mxu0 0
  %807 = vmatprep.subr.bf16.mxu0 0
  %808 = vmatpush1.bf16.msra.mxu0 0
  %809 = vmatprep.subr.bf16.mxu0 0
  %810 = vmatpush1.bf16.msra.mxu0 0
  %811 = vmatprep.subr.bf16.mxu0 0
  %812 = vmatpush1.bf16.msra.mxu0 0
  %813 = vmatprep.subr.bf16.mxu0 0
  %814 = vmatpush1.bf16.msra.mxu0 0
  %815 = vmatprep.subr.bf16.mxu0 0
  %816 = vmatpush1.bf16.msra.mxu0 0
  %817 = vmatprep.subr.bf16.mxu0 0
  %818 = vmatpush1.bf16.msra.mxu0 0
  %819 = vmatprep.subr.bf16.mxu0 0
  %820 = vmatpush1.bf16.msra.mxu0 0
  %821 = vmatprep.mubr.bf16.mxu0 0
  %822 = vmatmul.mubr.bf16.gmra.mrb[0].mxu0 %v766
  %v823 = vpop.f32.mrb[0].mxu0
  %v824 = vadd.f32 %v622, %v823
  %v825 = vpop.f32.mrb[0].mxu0
  %v826 = vpop.f32.mrb[0].mxu0
  %v827 = vadd.f32 %v622, %v826
  %v828 = vpop.f32.mrb[0].mxu0
  %829 = vmatprep.mubr.bf16.mxu0 0
  %830 = vmatmul.mubr.bf16.gmra.mrb[0].mxu0 %v769
  %v831 = vpop.f32.mrb[0].mxu0
  %v832 = vadd.f32 %v622, %v831
  %v833 = vpop.f32.mrb[0].mxu0
  %v834 = vpop.f32.mrb[0].mxu0
  %v835 = vadd.f32 %v622, %v834
  %v836 = vpop.f32.mrb[0].mxu0
  %837 = vmatprep.mubr.bf16.mxu0 0
  %838 = vmatmul.mubr.bf16.gmra.mrb[0].mxu0 %v772
  %v839 = vpop.f32.mrb[0].mxu0
  %v840 = vadd.f32 %v622, %v839
  %v841 = vpop.f32.mrb[0].mxu0
  %v842 = vpop.f32.mrb[0].mxu0
  %v843 = vadd.f32 %v622, %v842
  %v844 = vpop.f32.mrb[0].mxu0
  %845 = vmatprep.mubr.bf16.mxu0 0
  %846 = vmatmul.mubr.bf16.gmra.mrb[0].mxu0 %v775
  %v847 = vpop.f32.mrb[0].mxu0
  %v848 = vadd.f32 %v622, %v847
  %v849 = vpop.f32.mrb[0].mxu0
  %v850 = vpop.f32.mrb[0].mxu0
  %v851 = vadd.f32 %v622, %v850
  %v852 = vpop.f32.mrb[0].mxu0
  %853 = vmatprep.mubr.bf16.mxu0 0
  %854 = vmatmul.mubr.bf16.gmra.mrb[0].mxu0 %v778
  %v855 = vpop.f32.mrb[0].mxu0
  %v856 = vadd.f32 %v622, %v855
  %v857 = vpop.f32.mrb[0].mxu0
  %v858 = vpop.f32.mrb[0].mxu0
  %v859 = vadd.f32 %v622, %v858
  %v860 = vpop.f32.mrb[0].mxu0
  %861 = vmatprep.mubr.bf16.mxu0 0
  %862 = vmatmul.mubr.bf16.gmra.mrb[0].mxu0 %v781
  %v863 = vpop.f32.mrb[0].mxu0
  %v864 = vadd.f32 %v622, %v863
  %v865 = vpop.f32.mrb[0].mxu0
  %v866 = vpop.f32.mrb[0].mxu0
  %v867 = vadd.f32 %v622, %v866
  %v868 = vpop.f32.mrb[0].mxu0
  %869 = vmatprep.mubr.bf16.mxu0 0
  %870 = vmatmul.mubr.bf16.gmra.mrb[0].mxu0 %v784
  %v871 = vpop.f32.mrb[0].mxu0
  %v872 = vadd.f32 %v622, %v871
  %v873 = vpop.f32.mrb[0].mxu0
  %v874 = vpop.f32.mrb[0].mxu0
  %v875 = vadd.f32 %v622, %v874
  %v876 = vpop.f32.mrb[0].mxu0
  %877 = vmatprep.mubr.bf16.mxu0 0
  %878 = vmatmul.mubr.bf16.gmra.mrb[0].mxu0 %v787
  %v879 = vpop.f32.mrb[0].mxu0
  %v880 = vadd.f32 %v622, %v879
  %v881 = vpop.f32.mrb[0].mxu0
  %v882 = vpop.f32.mrb[0].mxu0
  %v883 = vadd.f32 %v622, %v882
  %v884 = vpop.f32.mrb[0].mxu0
  %885 = vdwg.mxu0
  %v886 = vpack.c.bf16 %v698, %v695
  %v887 = vpack.c.bf16 %v706, %v703
  %v888 = vpack.c.bf16 %v714, %v711
  %v889 = vpack.c.bf16 %v722, %v719
  %v890 = vpack.c.bf16 %v730, %v727
  %v891 = vpack.c.bf16 %v738, %v735
  %v892 = vpack.c.bf16 %v746, %v743
  %v893 = vpack.c.bf16 %v754, %v751
  %v894 = vld [vmem:[%s8] sm:$0xff]
  %v895 = vld [vmem:[%s8 + $0x8] sm:$0xff]
  %v896 = vld [vmem:[%s8 + $0x10] sm:$0xff]
  %v897 = vld [vmem:[%s8 + $0x18] sm:$0xff]
  %v898 = vld [vmem:[%s9] sm:$0x3]
  %v900 = vlaneseq
  %v901 = vshrl.u32 %v900, 7
  %v902 = vsub.s32 0, %v901
  %v903 = vrot.slane %v898, %v902
  %v904 = vlaneseq
  %v905 = vshrl.u32 %v904, 7
  %v906 = vsub.s32 1, %v905
  %v907 = vrot.slane %v898, %v906
  %v914 = vunpack.c.l.b16 %v894
  %v915 = vunpack.c.h.b16 %v894
  %v916 = vunpack.c.l.b16 %v895
  %v917 = vunpack.c.h.b16 %v895
  %v918 = vunpack.c.l.b16 %v896
  %v919 = vunpack.c.h.b16 %v896
  %v920 = vunpack.c.l.b16 %v897
  %v921 = vunpack.c.h.b16 %v897
  %v922 = vpack.c.b16 %v916, %v914
  %v923 = vpack.c.b16 %v917, %v915
  %v924 = vpack.c.b16 %v920, %v918
  %v925 = vpack.c.b16 %v921, %v919
  %v931 = vsel %vm79, %v886, 0
  %v934 = vsel %vm79, %v887, 0
  %v937 = vsel %vm79, %v888, 0
  %v940 = vsel %vm79, %v889, 0
  %v943 = vsel %vm79, %v890, 0
  %v946 = vsel %vm79, %v891, 0
  %v949 = vsel %vm79, %v892, 0
  %v952 = vsel %vm79, %v893, 0
  %954 = vmatprep.subr.bf16.mxu0 %v923
  %955 = vmatpush1.bf16.msra.mxu0 %v922
  %956 = vmatprep.subr.bf16.mxu0 %v925
  %957 = vmatpush1.bf16.msra.mxu0 %v924
  %958 = vmatprep.subr.bf16.mxu0 0
  %959 = vmatpush1.bf16.msra.mxu0 0
  %960 = vmatprep.subr.bf16.mxu0 0
  %961 = vmatpush1.bf16.msra.mxu0 0
  %962 = vmatprep.subr.bf16.mxu0 0
  %963 = vmatpush1.bf16.msra.mxu0 0
  %964 = vmatprep.subr.bf16.mxu0 0
  %965 = vmatpush1.bf16.msra.mxu0 0
  %966 = vmatprep.subr.bf16.mxu0 0
  %967 = vmatpush1.bf16.msra.mxu0 0
  %968 = vmatprep.subr.bf16.mxu0 0
  %969 = vmatpush1.bf16.msra.mxu0 0
  %970 = vmatprep.subr.bf16.mxu0 0
  %971 = vmatpush1.bf16.msra.mxu0 0
  %972 = vmatprep.subr.bf16.mxu0 0
  %973 = vmatpush1.bf16.msra.mxu0 0
  %974 = vmatprep.subr.bf16.mxu0 0
  %975 = vmatpush1.bf16.msra.mxu0 0
  %976 = vmatprep.subr.bf16.mxu0 0
  %977 = vmatpush1.bf16.msra.mxu0 0
  %978 = vmatprep.subr.bf16.mxu0 0
  %979 = vmatpush1.bf16.msra.mxu0 0
  %980 = vmatprep.subr.bf16.mxu0 0
  %981 = vmatpush1.bf16.msra.mxu0 0
  %982 = vmatprep.subr.bf16.mxu0 0
  %983 = vmatpush1.bf16.msra.mxu0 0
  %984 = vmatprep.subr.bf16.mxu0 0
  %985 = vmatpush1.bf16.msra.mxu0 0
  %986 = vmatprep.mubr.bf16.mxu0 0
  %987 = vmatmul.mubr.bf16.gmra.mrb[0].mxu0 %v931
  %v988 = vpop.f32.mrb[0].mxu0
  %v989 = vadd.f32 %v903, %v988
  %v990 = vpop.f32.mrb[0].mxu0
  %v991 = vadd.f32 %v907, %v990
  %v992 = vpop.f32.mrb[0].mxu0
  %v993 = vadd.f32 %v903, %v992
  %v994 = vpop.f32.mrb[0].mxu0
  %v995 = vadd.f32 %v907, %v994
  %996 = vmatprep.mubr.bf16.mxu0 0
  %997 = vmatmul.mubr.bf16.gmra.mrb[0].mxu0 %v934
  %v998 = vpop.f32.mrb[0].mxu0
  %v999 = vadd.f32 %v903, %v998
  %v1000 = vpop.f32.mrb[0].mxu0
  %v1001 = vadd.f32 %v907, %v1000
  %v1002 = vpop.f32.mrb[0].mxu0
  %v1003 = vadd.f32 %v903, %v1002
  %v1004 = vpop.f32.mrb[0].mxu0
  %v1005 = vadd.f32 %v907, %v1004
  %1006 = vmatprep.mubr.bf16.mxu0 0
  %1007 = vmatmul.mubr.bf16.gmra.mrb[0].mxu0 %v937
  %v1008 = vpop.f32.mrb[0].mxu0
  %v1009 = vadd.f32 %v903, %v1008
  %v1010 = vpop.f32.mrb[0].mxu0
  %v1011 = vadd.f32 %v907, %v1010
  %v1012 = vpop.f32.mrb[0].mxu0
  %v1013 = vadd.f32 %v903, %v1012
  %v1014 = vpop.f32.mrb[0].mxu0
  %v1015 = vadd.f32 %v907, %v1014
  %1016 = vmatprep.mubr.bf16.mxu0 0
  %1017 = vmatmul.mubr.bf16.gmra.mrb[0].mxu0 %v940
  %v1018 = vpop.f32.mrb[0].mxu0
  %v1019 = vadd.f32 %v903, %v1018
  %v1020 = vpop.f32.mrb[0].mxu0
  %v1021 = vadd.f32 %v907, %v1020
  %v1022 = vpop.f32.mrb[0].mxu0
  %v1023 = vadd.f32 %v903, %v1022
  %v1024 = vpop.f32.mrb[0].mxu0
  %v1025 = vadd.f32 %v907, %v1024
  %1026 = vmatprep.mubr.bf16.mxu0 0
  %1027 = vmatmul.mubr.bf16.gmra.mrb[0].mxu0 %v943
  %v1028 = vpop.f32.mrb[0].mxu0
  %v1029 = vadd.f32 %v903, %v1028
  %v1030 = vpop.f32.mrb[0].mxu0
  %v1031 = vadd.f32 %v907, %v1030
  %v1032 = vpop.f32.mrb[0].mxu0
  %v1033 = vadd.f32 %v903, %v1032
  %v1034 = vpop.f32.mrb[0].mxu0
  %v1035 = vadd.f32 %v907, %v1034
  %1036 = vmatprep.mubr.bf16.mxu0 0
  %1037 = vmatmul.mubr.bf16.gmra.mrb[0].mxu0 %v946
  %v1038 = vpop.f32.mrb[0].mxu0
  %v1039 = vadd.f32 %v903, %v1038
  %v1040 = vpop.f32.mrb[0].mxu0
  %v1041 = vadd.f32 %v907, %v1040
  %v1042 = vpop.f32.mrb[0].mxu0
  %v1043 = vadd.f32 %v903, %v1042
  %v1044 = vpop.f32.mrb[0].mxu0
  %v1045 = vadd.f32 %v907, %v1044
  %1046 = vmatprep.mubr.bf16.mxu0 0
  %1047 = vmatmul.mubr.bf16.gmra.mrb[0].mxu0 %v949
  %v1048 = vpop.f32.mrb[0].mxu0
  %v1049 = vadd.f32 %v903, %v1048
  %v1050 = vpop.f32.mrb[0].mxu0
  %v1051 = vadd.f32 %v907, %v1050
  %v1052 = vpop.f32.mrb[0].mxu0
  %v1053 = vadd.f32 %v903, %v1052
  %v1054 = vpop.f32.mrb[0].mxu0
  %v1055 = vadd.f32 %v907, %v1054
  %1056 = vmatprep.mubr.bf16.mxu0 0
  %1057 = vmatmul.mubr.bf16.gmra.mrb[0].mxu0 %v952
  %v1058 = vpop.f32.mrb[0].mxu0
  %v1059 = vadd.f32 %v903, %v1058
  %v1060 = vpop.f32.mrb[0].mxu0
  %v1061 = vadd.f32 %v907, %v1060
  %v1062 = vpop.f32.mrb[0].mxu0
  %v1063 = vadd.f32 %v903, %v1062
  %v1064 = vpop.f32.mrb[0].mxu0
  %v1065 = vadd.f32 %v907, %v1064
  %1066 = vdwg.mxu0
  %v1067 = vmax.f32 %v989, 0.0
  %v1068 = vmax.f32 %v991, 0.0
  %v1069 = vmax.f32 %v993, 0.0
  %v1070 = vmax.f32 %v995, 0.0
  %v1071 = vmax.f32 %v999, 0.0
  %v1072 = vmax.f32 %v1001, 0.0
  %v1073 = vmax.f32 %v1003, 0.0
  %v1074 = vmax.f32 %v1005, 0.0
  %v1075 = vmax.f32 %v1009, 0.0
  %v1076 = vmax.f32 %v1011, 0.0
  %v1077 = vmax.f32 %v1013, 0.0
  %v1078 = vmax.f32 %v1015, 0.0
  %v1079 = vmax.f32 %v1019, 0.0
  %v1080 = vmax.f32 %v1021, 0.0
  %v1081 = vmax.f32 %v1023, 0.0
  %v1082 = vmax.f32 %v1025, 0.0
  %v1083 = vmax.f32 %v1029, 0.0
  %v1084 = vmax.f32 %v1031, 0.0
  %v1085 = vmax.f32 %v1033, 0.0
  %v1086 = vmax.f32 %v1035, 0.0
  %v1087 = vmax.f32 %v1039, 0.0
  %v1088 = vmax.f32 %v1041, 0.0
  %v1089 = vmax.f32 %v1043, 0.0
  %v1090 = vmax.f32 %v1045, 0.0
  %v1091 = vmax.f32 %v1049, 0.0
  %v1092 = vmax.f32 %v1051, 0.0
  %v1093 = vmax.f32 %v1053, 0.0
  %v1094 = vmax.f32 %v1055, 0.0
  %v1095 = vmax.f32 %v1059, 0.0
  %v1096 = vmax.f32 %v1061, 0.0
  %v1097 = vmax.f32 %v1063, 0.0
  %v1098 = vmax.f32 %v1065, 0.0
  %v1099 = vpack.c.bf16 %v827, %v824
  %v1100 = vpack.c.bf16 %v835, %v832
  %v1101 = vpack.c.bf16 %v843, %v840
  %v1102 = vpack.c.bf16 %v851, %v848
  %v1103 = vpack.c.bf16 %v859, %v856
  %v1104 = vpack.c.bf16 %v867, %v864
  %v1105 = vpack.c.bf16 %v875, %v872
  %v1106 = vpack.c.bf16 %v883, %v880
  %v1107 = vld [vmem:[%s6] sm:$0xff]
  %v1108 = vld [vmem:[%s6 + $0x8] sm:$0xff]
  %v1109 = vld [vmem:[%s6 + $0x10] sm:$0xff]
  %v1110 = vld [vmem:[%s6 + $0x18] sm:$0xff]
  %v1111 = vld [vmem:[%s7] sm:$0x3]
  %v1113 = vlaneseq
  %v1114 = vshrl.u32 %v1113, 7
  %v1115 = vsub.s32 0, %v1114
  %v1116 = vrot.slane %v1111, %v1115
  %v1117 = vlaneseq
  %v1118 = vshrl.u32 %v1117, 7
  %v1119 = vsub.s32 1, %v1118
  %v1120 = vrot.slane %v1111, %v1119
  %v1127 = vunpack.c.l.b16 %v1107
  %v1128 = vunpack.c.h.b16 %v1107
  %v1129 = vunpack.c.l.b16 %v1108
  %v1130 = vunpack.c.h.b16 %v1108
  %v1131 = vunpack.c.l.b16 %v1109
  %v1132 = vunpack.c.h.b16 %v1109
  %v1133 = vunpack.c.l.b16 %v1110
  %v1134 = vunpack.c.h.b16 %v1110
  %v1135 = vpack.c.b16 %v1129, %v1127
  %v1136 = vpack.c.b16 %v1130, %v1128
  %v1137 = vpack.c.b16 %v1133, %v1131
  %v1138 = vpack.c.b16 %v1134, %v1132
  %v1144 = vsel %vm79, %v1099, 0
  %v1147 = vsel %vm79, %v1100, 0
  %v1150 = vsel %vm79, %v1101, 0
  %v1153 = vsel %vm79, %v1102, 0
  %v1156 = vsel %vm79, %v1103, 0
  %v1159 = vsel %vm79, %v1104, 0
  %v1162 = vsel %vm79, %v1105, 0
  %v1165 = vsel %vm79, %v1106, 0
  %1167 = vmatprep.subr.bf16.mxu0 %v1136
  %1168 = vmatpush1.bf16.msra.mxu0 %v1135
  %1169 = vmatprep.subr.bf16.mxu0 %v1138
  %1170 = vmatpush1.bf16.msra.mxu0 %v1137
  %1171 = vmatprep.subr.bf16.mxu0 0
  %1172 = vmatpush1.bf16.msra.mxu0 0
  %1173 = vmatprep.subr.bf16.mxu0 0
  %1174 = vmatpush1.bf16.msra.mxu0 0
  %1175 = vmatprep.subr.bf16.mxu0 0
  %1176 = vmatpush1.bf16.msra.mxu0 0
  %1177 = vmatprep.subr.bf16.mxu0 0
  %1178 = vmatpush1.bf16.msra.mxu0 0
  %1179 = vmatprep.subr.bf16.mxu0 0
  %1180 = vmatpush1.bf16.msra.mxu0 0
  %1181 = vmatprep.subr.bf16.mxu0 0
  %1182 = vmatpush1.bf16.msra.mxu0 0
  %1183 = vmatprep.subr.bf16.mxu0 0
  %1184 = vmatpush1.bf16.msra.mxu0 0
  %1185 = vmatprep.subr.bf16.mxu0 0
  %1186 = vmatpush1.bf16.msra.mxu0 0
  %1187 = vmatprep.subr.bf16.mxu0 0
  %1188 = vmatpush1.bf16.msra.mxu0 0
  %1189 = vmatprep.subr.bf16.mxu0 0
  %1190 = vmatpush1.bf16.msra.mxu0 0
  %1191 = vmatprep.subr.bf16.mxu0 0
  %1192 = vmatpush1.bf16.msra.mxu0 0
  %1193 = vmatprep.subr.bf16.mxu0 0
  %1194 = vmatpush1.bf16.msra.mxu0 0
  %1195 = vmatprep.subr.bf16.mxu0 0
  %1196 = vmatpush1.bf16.msra.mxu0 0
  %1197 = vmatprep.subr.bf16.mxu0 0
  %1198 = vmatpush1.bf16.msra.mxu0 0
  %1199 = vmatprep.mubr.bf16.mxu0 0
  %1200 = vmatmul.mubr.bf16.gmra.mrb[0].mxu0 %v1144
  %v1201 = vpop.f32.mrb[0].mxu0
  %v1202 = vadd.f32 %v1116, %v1201
  %v1203 = vpop.f32.mrb[0].mxu0
  %v1204 = vadd.f32 %v1120, %v1203
  %v1205 = vpop.f32.mrb[0].mxu0
  %v1206 = vadd.f32 %v1116, %v1205
  %v1207 = vpop.f32.mrb[0].mxu0
  %v1208 = vadd.f32 %v1120, %v1207
  %1209 = vmatprep.mubr.bf16.mxu0 0
  %1210 = vmatmul.mubr.bf16.gmra.mrb[0].mxu0 %v1147
  %v1211 = vpop.f32.mrb[0].mxu0
  %v1212 = vadd.f32 %v1116, %v1211
  %v1213 = vpop.f32.mrb[0].mxu0
  %v1214 = vadd.f32 %v1120, %v1213
  %v1215 = vpop.f32.mrb[0].mxu0
  %v1216 = vadd.f32 %v1116, %v1215
  %v1217 = vpop.f32.mrb[0].mxu0
  %v1218 = vadd.f32 %v1120, %v1217
  %1219 = vmatprep.mubr.bf16.mxu0 0
  %1220 = vmatmul.mubr.bf16.gmra.mrb[0].mxu0 %v1150
  %v1221 = vpop.f32.mrb[0].mxu0
  %v1222 = vadd.f32 %v1116, %v1221
  %v1223 = vpop.f32.mrb[0].mxu0
  %v1224 = vadd.f32 %v1120, %v1223
  %v1225 = vpop.f32.mrb[0].mxu0
  %v1226 = vadd.f32 %v1116, %v1225
  %v1227 = vpop.f32.mrb[0].mxu0
  %v1228 = vadd.f32 %v1120, %v1227
  %1229 = vmatprep.mubr.bf16.mxu0 0
  %1230 = vmatmul.mubr.bf16.gmra.mrb[0].mxu0 %v1153
  %v1231 = vpop.f32.mrb[0].mxu0
  %v1232 = vadd.f32 %v1116, %v1231
  %v1233 = vpop.f32.mrb[0].mxu0
  %v1234 = vadd.f32 %v1120, %v1233
  %v1235 = vpop.f32.mrb[0].mxu0
  %v1236 = vadd.f32 %v1116, %v1235
  %v1237 = vpop.f32.mrb[0].mxu0
  %v1238 = vadd.f32 %v1120, %v1237
  %1239 = vmatprep.mubr.bf16.mxu0 0
  %1240 = vmatmul.mubr.bf16.gmra.mrb[0].mxu0 %v1156
  %v1241 = vpop.f32.mrb[0].mxu0
  %v1242 = vadd.f32 %v1116, %v1241
  %v1243 = vpop.f32.mrb[0].mxu0
  %v1244 = vadd.f32 %v1120, %v1243
  %v1245 = vpop.f32.mrb[0].mxu0
  %v1246 = vadd.f32 %v1116, %v1245
  %v1247 = vpop.f32.mrb[0].mxu0
  %v1248 = vadd.f32 %v1120, %v1247
  %1249 = vmatprep.mubr.bf16.mxu0 0
  %1250 = vmatmul.mubr.bf16.gmra.mrb[0].mxu0 %v1159
  %v1251 = vpop.f32.mrb[0].mxu0
  %v1252 = vadd.f32 %v1116, %v1251
  %v1253 = vpop.f32.mrb[0].mxu0
  %v1254 = vadd.f32 %v1120, %v1253
  %v1255 = vpop.f32.mrb[0].mxu0
  %v1256 = vadd.f32 %v1116, %v1255
  %v1257 = vpop.f32.mrb[0].mxu0
  %v1258 = vadd.f32 %v1120, %v1257
  %1259 = vmatprep.mubr.bf16.mxu0 0
  %1260 = vmatmul.mubr.bf16.gmra.mrb[0].mxu0 %v1162
  %v1261 = vpop.f32.mrb[0].mxu0
  %v1262 = vadd.f32 %v1116, %v1261
  %v1263 = vpop.f32.mrb[0].mxu0
  %v1264 = vadd.f32 %v1120, %v1263
  %v1265 = vpop.f32.mrb[0].mxu0
  %v1266 = vadd.f32 %v1116, %v1265
  %v1267 = vpop.f32.mrb[0].mxu0
  %v1268 = vadd.f32 %v1120, %v1267
  %1269 = vmatprep.mubr.bf16.mxu0 0
  %1270 = vmatmul.mubr.bf16.gmra.mrb[0].mxu0 %v1165
  %v1271 = vpop.f32.mrb[0].mxu0
  %v1272 = vadd.f32 %v1116, %v1271
  %v1273 = vpop.f32.mrb[0].mxu0
  %v1274 = vadd.f32 %v1120, %v1273
  %v1275 = vpop.f32.mrb[0].mxu0
  %v1276 = vadd.f32 %v1116, %v1275
  %v1277 = vpop.f32.mrb[0].mxu0
  %v1278 = vadd.f32 %v1120, %v1277
  %1279 = vdwg.mxu0
  %v1280 = vmax.f32 %v1202, 0.0
  %v1281 = vmax.f32 %v1204, 0.0
  %v1282 = vmax.f32 %v1206, 0.0
  %v1283 = vmax.f32 %v1208, 0.0
  %v1284 = vmax.f32 %v1212, 0.0
  %v1285 = vmax.f32 %v1214, 0.0
  %v1286 = vmax.f32 %v1216, 0.0
  %v1287 = vmax.f32 %v1218, 0.0
  %v1288 = vmax.f32 %v1222, 0.0
  %v1289 = vmax.f32 %v1224, 0.0
  %v1290 = vmax.f32 %v1226, 0.0
  %v1291 = vmax.f32 %v1228, 0.0
  %v1292 = vmax.f32 %v1232, 0.0
  %v1293 = vmax.f32 %v1234, 0.0
  %v1294 = vmax.f32 %v1236, 0.0
  %v1295 = vmax.f32 %v1238, 0.0
  %v1296 = vmax.f32 %v1242, 0.0
  %v1297 = vmax.f32 %v1244, 0.0
  %v1298 = vmax.f32 %v1246, 0.0
  %v1299 = vmax.f32 %v1248, 0.0
  %v1300 = vmax.f32 %v1252, 0.0
  %v1301 = vmax.f32 %v1254, 0.0
  %v1302 = vmax.f32 %v1256, 0.0
  %v1303 = vmax.f32 %v1258, 0.0
  %v1304 = vmax.f32 %v1262, 0.0
  %v1305 = vmax.f32 %v1264, 0.0
  %v1306 = vmax.f32 %v1266, 0.0
  %v1307 = vmax.f32 %v1268, 0.0
  %v1308 = vmax.f32 %v1272, 0.0
  %v1309 = vmax.f32 %v1274, 0.0
  %v1310 = vmax.f32 %v1276, 0.0
  %v1311 = vmax.f32 %v1278, 0.0
  %v1312 = vpack.c.bf16 %v1282, %v1280
  %v1313 = vpack.c.bf16 %v1283, %v1281
  %v1314 = vpack.c.bf16 %v1286, %v1284
  %v1315 = vpack.c.bf16 %v1287, %v1285
  %v1316 = vpack.c.bf16 %v1290, %v1288
  %v1317 = vpack.c.bf16 %v1291, %v1289
  %v1318 = vpack.c.bf16 %v1294, %v1292
  %v1319 = vpack.c.bf16 %v1295, %v1293
  %v1320 = vpack.c.bf16 %v1298, %v1296
  %v1321 = vpack.c.bf16 %v1299, %v1297
  %v1322 = vpack.c.bf16 %v1302, %v1300
  %v1323 = vpack.c.bf16 %v1303, %v1301
  %v1324 = vpack.c.bf16 %v1306, %v1304
  %v1325 = vpack.c.bf16 %v1307, %v1305
  %v1326 = vpack.c.bf16 %v1310, %v1308
  %v1327 = vpack.c.bf16 %v1311, %v1309
  %v1328 = vld [vmem:[%s10] sm:$0xf]
  %v1329 = vld [vmem:[%s10 + $0x4] sm:$0xf]
  %v1330 = vld [vmem:[%s10 + $0x8] sm:$0xf]
  %v1331 = vld [vmem:[%s10 + $0xc] sm:$0xf]
  %v1332 = vld [vmem:[%s10 + $0x10] sm:$0xf]
  %v1333 = vld [vmem:[%s10 + $0x14] sm:$0xf]
  %v1334 = vld [vmem:[%s10 + $0x18] sm:$0xf]
  %v1335 = vld [vmem:[%s10 + $0x1c] sm:$0xf]
  %v1336 = vld [vmem:[%s10 + $0x20] sm:$0xf]
  %v1337 = vld [vmem:[%s10 + $0x24] sm:$0xf]
  %v1338 = vld [vmem:[%s10 + $0x28] sm:$0xf]
  %v1339 = vld [vmem:[%s10 + $0x2c] sm:$0xf]
  %v1340 = vld [vmem:[%s10 + $0x30] sm:$0xf]
  %v1341 = vld [vmem:[%s10 + $0x34] sm:$0xf]
  %v1342 = vld [vmem:[%s10 + $0x38] sm:$0xf]
  %v1343 = vld [vmem:[%s10 + $0x3c] sm:$0xf]
  %v1344 = vld [vmem:[%s10 + $0x40] sm:$0xf]
  %v1345 = vld [vmem:[%s10 + $0x44] sm:$0xf]
  %v1346 = vld [vmem:[%s10 + $0x48] sm:$0xf]
  %v1347 = vld [vmem:[%s10 + $0x4c] sm:$0xf]
  %v1348 = vld [vmem:[%s10 + $0x50] sm:$0xf]
  %v1349 = vld [vmem:[%s10 + $0x54] sm:$0xf]
  %v1350 = vld [vmem:[%s10 + $0x58] sm:$0xf]
  %v1351 = vld [vmem:[%s10 + $0x5c] sm:$0xf]
  %v1352 = vld [vmem:[%s10 + $0x60] sm:$0xf]
  %v1353 = vld [vmem:[%s10 + $0x64] sm:$0xf]
  %v1354 = vld [vmem:[%s10 + $0x68] sm:$0xf]
  %v1355 = vld [vmem:[%s10 + $0x6c] sm:$0xf]
  %v1356 = vld [vmem:[%s10 + $0x70] sm:$0xf]
  %v1357 = vld [vmem:[%s10 + $0x74] sm:$0xf]
  %v1358 = vld [vmem:[%s10 + $0x78] sm:$0xf]
  %v1359 = vld [vmem:[%s10 + $0x7c] sm:$0xf]
  %v1360 = vpack.c.bf16 %v1069, %v1067
  %v1361 = vpack.c.bf16 %v1070, %v1068
  %v1362 = vpack.c.bf16 %v1073, %v1071
  %v1363 = vpack.c.bf16 %v1074, %v1072
  %v1364 = vpack.c.bf16 %v1077, %v1075
  %v1365 = vpack.c.bf16 %v1078, %v1076
  %v1366 = vpack.c.bf16 %v1081, %v1079
  %v1367 = vpack.c.bf16 %v1082, %v1080
  %v1368 = vpack.c.bf16 %v1085, %v1083
  %v1369 = vpack.c.bf16 %v1086, %v1084
  %v1370 = vpack.c.bf16 %v1089, %v1087
  %v1371 = vpack.c.bf16 %v1090, %v1088
  %v1372 = vpack.c.bf16 %v1093, %v1091
  %v1373 = vpack.c.bf16 %v1094, %v1092
  %v1374 = vpack.c.bf16 %v1097, %v1095
  %v1375 = vpack.c.bf16 %v1098, %v1096
  %v1376 = vld [vmem:[%s11] sm:$0xf]
  %v1377 = vld [vmem:[%s11 + $0x4] sm:$0xf]
  %v1378 = vld [vmem:[%s11 + $0x8] sm:$0xf]
  %v1379 = vld [vmem:[%s11 + $0xc] sm:$0xf]
  %v1380 = vld [vmem:[%s11 + $0x10] sm:$0xf]
  %v1381 = vld [vmem:[%s11 + $0x14] sm:$0xf]
  %v1382 = vld [vmem:[%s11 + $0x18] sm:$0xf]
  %v1383 = vld [vmem:[%s11 + $0x1c] sm:$0xf]
  %v1384 = vld [vmem:[%s11 + $0x20] sm:$0xf]
  %v1385 = vld [vmem:[%s11 + $0x24] sm:$0xf]
  %v1386 = vld [vmem:[%s11 + $0x28] sm:$0xf]
  %v1387 = vld [vmem:[%s11 + $0x2c] sm:$0xf]
  %v1388 = vld [vmem:[%s11 + $0x30] sm:$0xf]
  %v1389 = vld [vmem:[%s11 + $0x34] sm:$0xf]
  %v1390 = vld [vmem:[%s11 + $0x38] sm:$0xf]
  %v1391 = vld [vmem:[%s11 + $0x3c] sm:$0xf]
  %v1392 = vld [vmem:[%s11 + $0x40] sm:$0xf]
  %v1393 = vld [vmem:[%s11 + $0x44] sm:$0xf]
  %v1394 = vld [vmem:[%s11 + $0x48] sm:$0xf]
  %v1395 = vld [vmem:[%s11 + $0x4c] sm:$0xf]
  %v1396 = vld [vmem:[%s11 + $0x50] sm:$0xf]
  %v1397 = vld [vmem:[%s11 + $0x54] sm:$0xf]
  %v1398 = vld [vmem:[%s11 + $0x58] sm:$0xf]
  %v1399 = vld [vmem:[%s11 + $0x5c] sm:$0xf]
  %v1400 = vld [vmem:[%s11 + $0x60] sm:$0xf]
  %v1401 = vld [vmem:[%s11 + $0x64] sm:$0xf]
  %v1402 = vld [vmem:[%s11 + $0x68] sm:$0xf]
  %v1403 = vld [vmem:[%s11 + $0x6c] sm:$0xf]
  %v1404 = vld [vmem:[%s11 + $0x70] sm:$0xf]
  %v1405 = vld [vmem:[%s11 + $0x74] sm:$0xf]
  %v1406 = vld [vmem:[%s11 + $0x78] sm:$0xf]
  %v1407 = vld [vmem:[%s11 + $0x7c] sm:$0xf]
  %v1440 = vunpack.c.l.b16 %v1376
  %v1441 = vunpack.c.l.b16 %v1377
  %v1442 = vunpack.c.l.b16 %v1378
  %v1443 = vunpack.c.l.b16 %v1379
  %v1444 = vunpack.c.l.b16 %v1380
  %v1445 = vunpack.c.l.b16 %v1381
  %v1446 = vunpack.c.l.b16 %v1382
  %v1447 = vunpack.c.l.b16 %v1383
  %v1448 = vunpack.c.l.b16 %v1384
  %v1449 = vunpack.c.l.b16 %v1385
  %v1450 = vunpack.c.l.b16 %v1386
  %v1451 = vunpack.c.l.b16 %v1387
  %v1452 = vunpack.c.l.b16 %v1388
  %v1453 = vunpack.c.l.b16 %v1389
  %v1454 = vunpack.c.l.b16 %v1390
  %v1455 = vunpack.c.l.b16 %v1391
  %v1456 = vunpack.c.l.b16 %v1392
  %v1457 = vunpack.c.l.b16 %v1393
  %v1458 = vunpack.c.l.b16 %v1394
  %v1459 = vunpack.c.l.b16 %v1395
  %v1460 = vunpack.c.l.b16 %v1396
  %v1461 = vunpack.c.l.b16 %v1397
  %v1462 = vunpack.c.l.b16 %v1398
  %v1463 = vunpack.c.l.b16 %v1399
  %v1464 = vunpack.c.l.b16 %v1400
  %v1465 = vunpack.c.l.b16 %v1401
  %v1466 = vunpack.c.l.b16 %v1402
  %v1467 = vunpack.c.l.b16 %v1403
  %v1468 = vunpack.c.l.b16 %v1404
  %v1469 = vunpack.c.l.b16 %v1405
  %v1470 = vunpack.c.l.b16 %v1406
  %v1471 = vunpack.c.l.b16 %v1407
  %v1472 = vpack.c.b16 %v1441, %v1440
  %v1473 = vpack.c.b16 %v1443, %v1442
  %v1474 = vpack.c.b16 %v1445, %v1444
  %v1475 = vpack.c.b16 %v1447, %v1446
  %v1476 = vpack.c.b16 %v1449, %v1448
  %v1477 = vpack.c.b16 %v1451, %v1450
  %v1478 = vpack.c.b16 %v1453, %v1452
  %v1479 = vpack.c.b16 %v1455, %v1454
  %v1480 = vpack.c.b16 %v1457, %v1456
  %v1481 = vpack.c.b16 %v1459, %v1458
  %v1482 = vpack.c.b16 %v1461, %v1460
  %v1483 = vpack.c.b16 %v1463, %v1462
  %v1484 = vpack.c.b16 %v1465, %v1464
  %v1485 = vpack.c.b16 %v1467, %v1466
  %v1486 = vpack.c.b16 %v1469, %v1468
  %v1487 = vpack.c.b16 %v1471, %v1470
  %1504 = vmatprep.subr.bf16.mxu0 0
  %1505 = vmatpush1.bf16.msra.mxu0 %v1472
  %1506 = vmatprep.subr.bf16.mxu0 0
  %1507 = vmatpush1.bf16.msra.mxu0 %v1473
  %1508 = vmatprep.subr.bf16.mxu0 0
  %1509 = vmatpush1.bf16.msra.mxu0 %v1474
  %1510 = vmatprep.subr.bf16.mxu0 0
  %1511 = vmatpush1.bf16.msra.mxu0 %v1475
  %1512 = vmatprep.subr.bf16.mxu0 0
  %1513 = vmatpush1.bf16.msra.mxu0 %v1476
  %1514 = vmatprep.subr.bf16.mxu0 0
  %1515 = vmatpush1.bf16.msra.mxu0 %v1477
  %1516 = vmatprep.subr.bf16.mxu0 0
  %1517 = vmatpush1.bf16.msra.mxu0 %v1478
  %1518 = vmatprep.subr.bf16.mxu0 0
  %1519 = vmatpush1.bf16.msra.mxu0 %v1479
  %1520 = vmatprep.subr.bf16.mxu0 0
  %1521 = vmatpush1.bf16.msra.mxu0 %v1480
  %1522 = vmatprep.subr.bf16.mxu0 0
  %1523 = vmatpush1.bf16.msra.mxu0 %v1481
  %1524 = vmatprep.subr.bf16.mxu0 0
  %1525 = vmatpush1.bf16.msra.mxu0 %v1482
  %1526 = vmatprep.subr.bf16.mxu0 0
  %1527 = vmatpush1.bf16.msra.mxu0 %v1483
  %1528 = vmatprep.subr.bf16.mxu0 0
  %1529 = vmatpush1.bf16.msra.mxu0 %v1484
  %1530 = vmatprep.subr.bf16.mxu0 0
  %1531 = vmatpush1.bf16.msra.mxu0 %v1485
  %1532 = vmatprep.subr.bf16.mxu0 0
  %1533 = vmatpush1.bf16.msra.mxu0 %v1486
  %1534 = vmatprep.subr.bf16.mxu0 0
  %1535 = vmatpush1.bf16.msra.mxu0 %v1487
  %1536 = vmatprep.mubr.bf16.mxu0 %v1361
  %1537 = vmatmul.mubr.bf16.gmra.mrb[0].mxu0 %v1360
  %v1538 = vpop.f32.mrb[0].mxu0
  %v1539 = vadd.f32 0.0, %v1538
  %v1540 = vpop.f32.mrb[0].mxu0
  %v1541 = vpop.f32.mrb[0].mxu0
  %v1542 = vadd.f32 0.0, %v1541
  %v1543 = vpop.f32.mrb[0].mxu0
  %1544 = vmatprep.mubr.bf16.mxu0 %v1363
  %1545 = vmatmul.mubr.bf16.gmra.mrb[0].mxu0 %v1362
  %v1546 = vpop.f32.mrb[0].mxu0
  %v1547 = vadd.f32 0.0, %v1546
  %v1548 = vpop.f32.mrb[0].mxu0
  %v1549 = vpop.f32.mrb[0].mxu0
  %v1550 = vadd.f32 0.0, %v1549
  %v1551 = vpop.f32.mrb[0].mxu0
  %1552 = vmatprep.mubr.bf16.mxu0 %v1365
  %1553 = vmatmul.mubr.bf16.gmra.mrb[0].mxu0 %v1364
  %v1554 = vpop.f32.mrb[0].mxu0
  %v1555 = vadd.f32 0.0, %v1554
  %v1556 = vpop.f32.mrb[0].mxu0
  %v1557 = vpop.f32.mrb[0].mxu0
  %v1558 = vadd.f32 0.0, %v1557
  %v1559 = vpop.f32.mrb[0].mxu0
  %1560 = vmatprep.mubr.bf16.mxu0 %v1367
  %1561 = vmatmul.mubr.bf16.gmra.mrb[0].mxu0 %v1366
  %v1562 = vpop.f32.mrb[0].mxu0
  %v1563 = vadd.f32 0.0, %v1562
  %v1564 = vpop.f32.mrb[0].mxu0
  %v1565 = vpop.f32.mrb[0].mxu0
  %v1566 = vadd.f32 0.0, %v1565
  %v1567 = vpop.f32.mrb[0].mxu0
  %1568 = vmatprep.mubr.bf16.mxu0 %v1369
  %1569 = vmatmul.mubr.bf16.gmra.mrb[0].mxu0 %v1368
  %v1570 = vpop.f32.mrb[0].mxu0
  %v1571 = vadd.f32 0.0, %v1570
  %v1572 = vpop.f32.mrb[0].mxu0
  %v1573 = vpop.f32.mrb[0].mxu0
  %v1574 = vadd.f32 0.0, %v1573
  %v1575 = vpop.f32.mrb[0].mxu0
  %1576 = vmatprep.mubr.bf16.mxu0 %v1371
  %1577 = vmatmul.mubr.bf16.gmra.mrb[0].mxu0 %v1370
  %v1578 = vpop.f32.mrb[0].mxu0
  %v1579 = vadd.f32 0.0, %v1578
  %v1580 = vpop.f32.mrb[0].mxu0
  %v1581 = vpop.f32.mrb[0].mxu0
  %v1582 = vadd.f32 0.0, %v1581
  %v1583 = vpop.f32.mrb[0].mxu0
  %1584 = vmatprep.mubr.bf16.mxu0 %v1373
  %1585 = vmatmul.mubr.bf16.gmra.mrb[0].mxu0 %v1372
  %v1586 = vpop.f32.mrb[0].mxu0
  %v1587 = vadd.f32 0.0, %v1586
  %v1588 = vpop.f32.mrb[0].mxu0
  %v1589 = vpop.f32.mrb[0].mxu0
  %v1590 = vadd.f32 0.0, %v1589
  %v1591 = vpop.f32.mrb[0].mxu0
  %1592 = vmatprep.mubr.bf16.mxu0 %v1375
  %1593 = vmatmul.mubr.bf16.gmra.mrb[0].mxu0 %v1374
  %v1594 = vpop.f32.mrb[0].mxu0
  %v1595 = vadd.f32 0.0, %v1594
  %v1596 = vpop.f32.mrb[0].mxu0
  %v1597 = vpop.f32.mrb[0].mxu0
  %v1598 = vadd.f32 0.0, %v1597
  %v1599 = vpop.f32.mrb[0].mxu0
  %1600 = vdwg.mxu0
  %v1633 = vunpack.c.l.b16 %v1328
  %v1634 = vunpack.c.l.b16 %v1329
  %v1635 = vunpack.c.l.b16 %v1330
  %v1636 = vunpack.c.l.b16 %v1331
  %v1637 = vunpack.c.l.b16 %v1332
  %v1638 = vunpack.c.l.b16 %v1333
  %v1639 = vunpack.c.l.b16 %v1334
  %v1640 = vunpack.c.l.b16 %v1335
  %v1641 = vunpack.c.l.b16 %v1336
  %v1642 = vunpack.c.l.b16 %v1337
  %v1643 = vunpack.c.l.b16 %v1338
  %v1644 = vunpack.c.l.b16 %v1339
  %v1645 = vunpack.c.l.b16 %v1340
  %v1646 = vunpack.c.l.b16 %v1341
  %v1647 = vunpack.c.l.b16 %v1342
  %v1648 = vunpack.c.l.b16 %v1343
  %v1649 = vunpack.c.l.b16 %v1344
  %v1650 = vunpack.c.l.b16 %v1345
  %v1651 = vunpack.c.l.b16 %v1346
  %v1652 = vunpack.c.l.b16 %v1347
  %v1653 = vunpack.c.l.b16 %v1348
  %v1654 = vunpack.c.l.b16 %v1349
  %v1655 = vunpack.c.l.b16 %v1350
  %v1656 = vunpack.c.l.b16 %v1351
  %v1657 = vunpack.c.l.b16 %v1352
  %v1658 = vunpack.c.l.b16 %v1353
  %v1659 = vunpack.c.l.b16 %v1354
  %v1660 = vunpack.c.l.b16 %v1355
  %v1661 = vunpack.c.l.b16 %v1356
  %v1662 = vunpack.c.l.b16 %v1357
  %v1663 = vunpack.c.l.b16 %v1358
  %v1664 = vunpack.c.l.b16 %v1359
  %v1665 = vpack.c.b16 %v1634, %v1633
  %v1666 = vpack.c.b16 %v1636, %v1635
  %v1667 = vpack.c.b16 %v1638, %v1637
  %v1668 = vpack.c.b16 %v1640, %v1639
  %v1669 = vpack.c.b16 %v1642, %v1641
  %v1670 = vpack.c.b16 %v1644, %v1643
  %v1671 = vpack.c.b16 %v1646, %v1645
  %v1672 = vpack.c.b16 %v1648, %v1647
  %v1673 = vpack.c.b16 %v1650, %v1649
  %v1674 = vpack.c.b16 %v1652, %v1651
  %v1675 = vpack.c.b16 %v1654, %v1653
  %v1676 = vpack.c.b16 %v1656, %v1655
  %v1677 = vpack.c.b16 %v1658, %v1657
  %v1678 = vpack.c.b16 %v1660, %v1659
  %v1679 = vpack.c.b16 %v1662, %v1661
  %v1680 = vpack.c.b16 %v1664, %v1663
  %1697 = vmatprep.subr.bf16.mxu0 0
  %1698 = vmatpush1.bf16.msra.mxu0 %v1665
  %1699 = vmatprep.subr.bf16.mxu0 0
  %1700 = vmatpush1.bf16.msra.mxu0 %v1666
  %1701 = vmatprep.subr.bf16.mxu0 0
  %1702 = vmatpush1.bf16.msra.mxu0 %v1667
  %1703 = vmatprep.subr.bf16.mxu0 0
  %1704 = vmatpush1.bf16.msra.mxu0 %v1668
  %1705 = vmatprep.subr.bf16.mxu0 0
  %1706 = vmatpush1.bf16.msra.mxu0 %v1669
  %1707 = vmatprep.subr.bf16.mxu0 0
  %1708 = vmatpush1.bf16.msra.mxu0 %v1670
  %1709 = vmatprep.subr.bf16.mxu0 0
  %1710 = vmatpush1.bf16.msra.mxu0 %v1671
  %1711 = vmatprep.subr.bf16.mxu0 0
  %1712 = vmatpush1.bf16.msra.mxu0 %v1672
  %1713 = vmatprep.subr.bf16.mxu0 0
  %1714 = vmatpush1.bf16.msra.mxu0 %v1673
  %1715 = vmatprep.subr.bf16.mxu0 0
  %1716 = vmatpush1.bf16.msra.mxu0 %v1674
  %1717 = vmatprep.subr.bf16.mxu0 0
  %1718 = vmatpush1.bf16.msra.mxu0 %v1675
  %1719 = vmatprep.subr.bf16.mxu0 0
  %1720 = vmatpush1.bf16.msra.mxu0 %v1676
  %1721 = vmatprep.subr.bf16.mxu0 0
  %1722 = vmatpush1.bf16.msra.mxu0 %v1677
  %1723 = vmatprep.subr.bf16.mxu0 0
  %1724 = vmatpush1.bf16.msra.mxu0 %v1678
  %1725 = vmatprep.subr.bf16.mxu0 0
  %1726 = vmatpush1.bf16.msra.mxu0 %v1679
  %1727 = vmatprep.subr.bf16.mxu0 0
  %1728 = vmatpush1.bf16.msra.mxu0 %v1680
  %1729 = vmatprep.mubr.bf16.mxu0 %v1313
  %1730 = vmatmul.mubr.bf16.gmra.mrb[0].mxu0 %v1312
  %v1731 = vpop.f32.mrb[0].mxu0
  %v1732 = vadd.f32 %v1539, %v1731
  %v1733 = vpop.f32.mrb[0].mxu0
  %v1734 = vpop.f32.mrb[0].mxu0
  %v1735 = vadd.f32 %v1542, %v1734
  %v1736 = vpop.f32.mrb[0].mxu0
  %1737 = vmatprep.mubr.bf16.mxu0 %v1315
  %1738 = vmatmul.mubr.bf16.gmra.mrb[0].mxu0 %v1314
  %v1739 = vpop.f32.mrb[0].mxu0
  %v1740 = vadd.f32 %v1547, %v1739
  %v1741 = vpop.f32.mrb[0].mxu0
  %v1742 = vpop.f32.mrb[0].mxu0
  %v1743 = vadd.f32 %v1550, %v1742
  %v1744 = vpop.f32.mrb[0].mxu0
  %1745 = vmatprep.mubr.bf16.mxu0 %v1317
  %1746 = vmatmul.mubr.bf16.gmra.mrb[0].mxu0 %v1316
  %v1747 = vpop.f32.mrb[0].mxu0
  %v1748 = vadd.f32 %v1555, %v1747
  %v1749 = vpop.f32.mrb[0].mxu0
  %v1750 = vpop.f32.mrb[0].mxu0
  %v1751 = vadd.f32 %v1558, %v1750
  %v1752 = vpop.f32.mrb[0].mxu0
  %1753 = vmatprep.mubr.bf16.mxu0 %v1319
  %1754 = vmatmul.mubr.bf16.gmra.mrb[0].mxu0 %v1318
  %v1755 = vpop.f32.mrb[0].mxu0
  %v1756 = vadd.f32 %v1563, %v1755
  %v1757 = vpop.f32.mrb[0].mxu0
  %v1758 = vpop.f32.mrb[0].mxu0
  %v1759 = vadd.f32 %v1566, %v1758
  %v1760 = vpop.f32.mrb[0].mxu0
  %1761 = vmatprep.mubr.bf16.mxu0 %v1321
  %1762 = vmatmul.mubr.bf16.gmra.mrb[0].mxu0 %v1320
  %v1763 = vpop.f32.mrb[0].mxu0
  %v1764 = vadd.f32 %v1571, %v1763
  %v1765 = vpop.f32.mrb[0].mxu0
  %v1766 = vpop.f32.mrb[0].mxu0
  %v1767 = vadd.f32 %v1574, %v1766
  %v1768 = vpop.f32.mrb[0].mxu0
  %1769 = vmatprep.mubr.bf16.mxu0 %v1323
  %1770 = vmatmul.mubr.bf16.gmra.mrb[0].mxu0 %v1322
  %v1771 = vpop.f32.mrb[0].mxu0
  %v1772 = vadd.f32 %v1579, %v1771
  %v1773 = vpop.f32.mrb[0].mxu0
  %v1774 = vpop.f32.mrb[0].mxu0
  %v1775 = vadd.f32 %v1582, %v1774
  %v1776 = vpop.f32.mrb[0].mxu0
  %1777 = vmatprep.mubr.bf16.mxu0 %v1325
  %1778 = vmatmul.mubr.bf16.gmra.mrb[0].mxu0 %v1324
  %v1779 = vpop.f32.mrb[0].mxu0
  %v1780 = vadd.f32 %v1587, %v1779
  %v1781 = vpop.f32.mrb[0].mxu0
  %v1782 = vpop.f32.mrb[0].mxu0
  %v1783 = vadd.f32 %v1590, %v1782
  %v1784 = vpop.f32.mrb[0].mxu0
  %1785 = vmatprep.mubr.bf16.mxu0 %v1327
  %1786 = vmatmul.mubr.bf16.gmra.mrb[0].mxu0 %v1326
  %v1787 = vpop.f32.mrb[0].mxu0
  %v1788 = vadd.f32 %v1595, %v1787
  %v1789 = vpop.f32.mrb[0].mxu0
  %v1790 = vpop.f32.mrb[0].mxu0
  %v1791 = vadd.f32 %v1598, %v1790
  %v1792 = vpop.f32.mrb[0].mxu0
  %1793 = vdwg.mxu0
  %v1794 = vld [vmem:[%s12] sm:$0x1]
  %v1796 = vlaneseq
  %v1797 = vshrl.u32 %v1796, 7
  %v1798 = vsub.s32 0, %v1797
  %v1799 = vrot.slane %v1794, %v1798
  %v1801 = vadd.f32 %v1732, %v1799
  %v1802 = vadd.f32 %v1735, %v1799
  %v1803 = vadd.f32 %v1740, %v1799
  %v1804 = vadd.f32 %v1743, %v1799
  %v1805 = vadd.f32 %v1748, %v1799
  %v1806 = vadd.f32 %v1751, %v1799
  %v1807 = vadd.f32 %v1756, %v1799
  %v1808 = vadd.f32 %v1759, %v1799
  %v1809 = vadd.f32 %v1764, %v1799
  %v1810 = vadd.f32 %v1767, %v1799
  %v1811 = vadd.f32 %v1772, %v1799
  %v1812 = vadd.f32 %v1775, %v1799
  %v1813 = vadd.f32 %v1780, %v1799
  %v1814 = vadd.f32 %v1783, %v1799
  %v1815 = vadd.f32 %v1788, %v1799
  %v1816 = vadd.f32 %v1791, %v1799
  %1817 = vst [vmem:[%s13] sm:$0xff] %v1801
  %1818 = vst [vmem:[%s13 + $0x8] sm:$0xff] %v1802
  %1819 = vst [vmem:[%s13 + $0x10] sm:$0xff] %v1803
  %1820 = vst [vmem:[%s13 + $0x18] sm:$0xff] %v1804
  %1821 = vst [vmem:[%s13 + $0x20] sm:$0xff] %v1805
  %1822 = vst [vmem:[%s13 + $0x28] sm:$0xff] %v1806
  %1823 = vst [vmem:[%s13 + $0x30] sm:$0xff] %v1807
  %1824 = vst [vmem:[%s13 + $0x38] sm:$0xff] %v1808
  %1825 = vst [vmem:[%s13 + $0x40] sm:$0xff] %v1809
  %1826 = vst [vmem:[%s13 + $0x48] sm:$0xff] %v1810
  %1827 = vst [vmem:[%s13 + $0x50] sm:$0xff] %v1811
  %1828 = vst [vmem:[%s13 + $0x58] sm:$0xff] %v1812
  %1829 = vst [vmem:[%s13 + $0x60] sm:$0xff] %v1813
  %1830 = vst [vmem:[%s13 + $0x68] sm:$0xff] %v1814
  %1831 = vst [vmem:[%s13 + $0x70] sm:$0xff] %v1815
  %1832 = vst [vmem:[%s13 + $0x78] sm:$0xff] %v1816
  // Predicated region
  $region54: #{pair_predictor_forward.1} parent=0 // pred_check
    _
  $region55: #{pair_predictor_forward.1} parent=0 // pred_check_branch
    %1834 = sbr.rel (0) target = $region57
  $region56: #{pair_predictor_forward.1} parent=0 // pred_region
    _
  $region57: #{pair_predictor_forward.1} parent=0 // pred_fallthru
    _
  // Predicated region
  $region58: #{pair_predictor_forward.1} parent=0 // pred_check
    _
  $region59: #{pair_predictor_forward.1} parent=0 // pred_check_branch
    %1836 = sbr.rel (0) target = $region61
  $region60: #{pair_predictor_forward.1} parent=0 // pred_region
    _
  $region61: #{pair_predictor_forward.1} parent=0 // pred_fallthru
    _

</llo_original>
